<compile_context>
chip_gen: v5e
topology: v5e:2x2
jax: 0.10.0
libtpu: 0.0.40
codegen_flags: <defaults>
</compile_context>

<pallas_src>
import functools

import numpy as np
import jax
import jax.numpy as jnp
from jax import lax
from jax.experimental import pallas as pl
from jax.experimental.pallas import tpu as pltpu


def _conv_group_kernel(x_ref, w_ref, b_ref, o_ref, h_scr, *, num_stages,
                       blocks_per_stage, filter_size, l_final, matmul_dtype):
    """One grid step = `Gb` lane-packed groups of batch elements.

    x_ref : (Gb, Lp, PC)          input, channels-last; PC = pack*C, Lp % 8 == 0
    w_ref : (NB, F, PC, PC)       folded block-diagonal per-tap weights (matmul dtype)
    b_ref : (NB, PC)              folded bias (conv bias + eval-mode BN), f32
    o_ref : (Gb, L_final, PC)
    h_scr : (Gb*Lp + slack, PC)   f32 VMEM staging buffer for shifted-tap loads
    """
    F = filter_size
    Gb, Lp, PC = x_ref.shape
    GL = Gb * Lp
    slack = h_scr.shape[0] - GL

    # Keep the (never-emitted) slack rows finite; shifted taps read them.
    h_scr[pl.ds(GL, slack), :] = jnp.zeros((slack, PC), h_scr.dtype)

    # All Gb groups stacked on the matmul M axis (Lp % 8 == 0 -> cheap reshape).
    # Row g*Lp + t holds temporal position t of packed group g throughout; rows
    # past the shrinking valid length per group are garbage and never read for
    # any valid output row (row r only reads rows r..r+F-1).
    cur = x_ref[...].astype(jnp.float32).reshape(GL, PC)

    for s in range(num_stages):
        ident = cur                                      # stage residual (f32)
        for blk in range(blocks_per_stage):
            idx = s * blocks_per_stage + blk
            # Stage the block input once in VMEM so each tap is an offset load
            # instead of a materialized F*PC-wide im2col copy.
            h_scr[pl.ds(0, GL), :] = cur
            acc = None
            for k in range(F):
                lhs = h_scr[pl.ds(k, GL), :].astype(matmul_dtype)
                d = jnp.dot(lhs, w_ref[idx, k],
                            preferred_element_type=jnp.float32)
                acc = d if acc is None else acc + d
            cur = jnp.maximum(acc + b_ref[idx][None, :], 0.0)  # bias + ReLU (f32)
        cur = cur + ident                                # residual (positions align)

    o_ref[...] = cur.reshape(Gb, Lp, PC)[:, :l_final, :].astype(o_ref.dtype)


def conv1d_group_pallas(x_ncl, w_folded, b_folded, *, num_stages,
                        blocks_per_stage, filter_size,
                        matmul_dtype=jnp.bfloat16):
    """x_ncl: (B, C, L) float32 (PyTorch NCL layout). Returns (B, C, L_final).

    w_folded: (NB, F, C, C)  [block, tap, c_in, c_out], eval-mode BN folded in
    b_folded: (NB, C)
    """
    B, C, L = x_ncl.shape
    F = filter_size
    NB = num_stages * blocks_per_stage
    assert w_folded.shape == (NB, F, C, C), w_folded.shape
    assert b_folded.shape == (NB, C), b_folded.shape

    trunc = 2 * F - 2  # module hard-codes truncate_amount = 2*filter_size - 2
    assert blocks_per_stage * (F - 1) == trunc, (
        "Conv1dGroup's truncate_amount = 2*filter_size - 2 only matches the "
        "stage output length for blocks_per_stage == 2 (or filter_size == 1).")
    L_final = L - num_stages * trunc
    assert L_final > 0

    # ---- lane packing: `pack` batch elements on the 128-lane axis ----------
    pack = max(1, min(128 // max(C, 1), B))
    if B >= 2:
        pack = max(1, min(pack, B // 2))   # keep >= 2 groups (v7x: 2 TensorCores)
    PC = pack * C
    Lp = 8 * pl.cdiv(L, 8)                 # pad time so per-group rows tile on sublanes
    G_needed = pl.cdiv(B, pack)

    # ---- groups per grid step: fill MXU M, stay inside VMEM, >= 2 steps ----
    # Per-group f32 VMEM: double-buffered in/out blocks + live values
    # (cur / ident / acc) + the staging scratch.
    per_group_bytes = (6 * Lp + 2 * L_final) * PC * 4
    vmem_act_budget = 12 * 1024 * 1024     # conservative even for v7x (64 MiB VMEM)
    gb = max(1, min(16, vmem_act_budget // per_group_bytes))
    if G_needed >= 2:
        gb = max(1, min(gb, G_needed // 2))  # guarantee >= 2 grid steps
    gb = min(gb, G_needed)
    steps = pl.cdiv(G_needed, gb)
    G = steps * gb
    B_pad = G * pack

    # ---- wrapper-side packing to (G, Lp, pack*C), channels-last ------------
    x = x_ncl.astype(jnp.float32)
    if B_pad != B or Lp != L:
        x = jnp.pad(x, ((0, B_pad - B), (0, 0), (0, Lp - L)))
    x_pkd = x.reshape(G, pack, C, Lp).transpose(0, 3, 1, 2).reshape(G, Lp, PC)

    # Block-diagonal fold so each lane-packed batch element is convolved
    # independently: W[n,k, p*C+i, q*C+j] = delta(p,q) * w_folded[n,k,i,j]
    eye_p = jnp.eye(pack, dtype=w_folded.dtype)
    w_pkd = jnp.einsum('pq,nkij->nkpiqj', eye_p, w_folded)
    w_pkd = w_pkd.reshape(NB, F, PC, PC).astype(matmul_dtype)
    b_pkd = jnp.tile(b_folded, (1, pack)).astype(jnp.float32)       # (NB, PC)

    md_bytes = int(np.dtype(matmul_dtype).itemsize)
    slack = max(8, 8 * pl.cdiv(F - 1, 8))
    scr_rows = gb * Lp + slack

    vmem_est = (gb * per_group_bytes
                + 2 * NB * F * PC * PC * md_bytes     # weights (pipeline keeps 2 bufs)
                + 2 * NB * PC * 4
                + scr_rows * PC * 4
                + (2 << 20))                          # spill / temporaries headroom
    vmem_limit = int(min(max(2 * vmem_est, 32 << 20), 48 << 20))

    flops = 2 * G * Lp * PC * PC * F * NB
    bytes_accessed = (G * Lp * PC * 4 + G * L_final * PC * 4
                      + NB * F * PC * PC * md_bytes + NB * PC * 4)

    kernel = functools.partial(
        _conv_group_kernel,
        num_stages=num_stages,
        blocks_per_stage=blocks_per_stage,
        filter_size=F,
        l_final=L_final,
        matmul_dtype=matmul_dtype,
    )

    out_pkd = pl.pallas_call(
        kernel,
        out_shape=jax.ShapeDtypeStruct((G, L_final, PC), jnp.float32),
        grid=(steps,),
        in_specs=[
            pl.BlockSpec((gb, Lp, PC), lambda g: (g, 0, 0)),
            # Constant index_map: fetched once, re-used across all grid steps.
            pl.BlockSpec((NB, F, PC, PC), lambda g: (0, 0, 0, 0)),
            pl.BlockSpec((NB, PC), lambda g: (0, 0)),
        ],
        out_specs=pl.BlockSpec((gb, L_final, PC), lambda g: (g, 0, 0)),
        scratch_shapes=[pltpu.VMEM((scr_rows, PC), jnp.float32)],
        compiler_params=pltpu.CompilerParams(
            dimension_semantics=("parallel",),
            vmem_limit_bytes=vmem_limit),
        cost_estimate=pl.CostEstimate(
            flops=flops, transcendentals=0, bytes_accessed=bytes_accessed),
    )(x_pkd, w_pkd, b_pkd)

    # (G, L_final, pack*C) -> (B, C, L_final); padded batch lanes/groups compute
    # garbage and are sliced off here.
    out = out_pkd.reshape(G, L_final, pack, C).transpose(0, 2, 3, 1)
    return out.reshape(B_pad, C, L_final)[:B]


def reference_forward(x_ncl, weights, biases, gammas, betas, means, variances,
                      *, num_stages, blocks_per_stage, filter_size, eps=1e-3):
    """Pure-JAX reference matching the PyTorch forward (eval-mode BN)."""
    F = filter_size
    trunc = 2 * F - 2
    x = x_ncl
    for s in range(num_stages):
        ident = x[:, :, : x.shape[2] - trunc]
        h = x
        for blk in range(blocks_per_stage):
            idx = s * blocks_per_stage + blk
            h = lax.conv_general_dilated(
                h, weights[idx], window_strides=(1,), padding="VALID",
                dimension_numbers=("NCH", "OIH", "NCH"))
            h = h + biases[idx][None, :, None]
            scale = gammas[idx] / jnp.sqrt(variances[idx] + eps)
            h = (h - means[idx][None, :, None]) * scale[None, :, None] \
                + betas[idx][None, :, None]
            h = jnp.maximum(h, 0.0)
        x = h + ident
    return x


if __name__ == "__main__":
    # Small shapes consistent with the module.  B=16, C=32 -> pack=4, 4 packed
    # groups, Gb=2 groups per grid step -> 2 parallel steps (both v7x TCs busy).
    B = 16                # batch
    C = 32                # channels (constant through every block)
    L = 48                # input temporal length
    F = 3                 # filter_size
    NUM_STAGES = 2
    BLOCKS_PER_STAGE = 2  # truncate_amount = 2*F-2 requires 2 blocks per stage
    EPS = 1e-3
    NB = NUM_STAGES * BLOCKS_PER_STAGE

    key = jax.random.PRNGKey(0)
    keys = jax.random.split(key, 7)

    x = jax.random.normal(keys[0], (B, C, L), dtype=jnp.float32)

    # Deterministic synthetic parameters (shapes from the module's __init__).
    conv_w = 0.2 * jax.random.normal(keys[1], (NB, C, C, F), dtype=jnp.float32)
    conv_b = 0.1 * jax.random.normal(keys[2], (NB, C), dtype=jnp.float32)
    bn_gamma = 1.0 + 0.1 * jax.random.normal(keys[3], (NB, C), dtype=jnp.float32)
    bn_beta = 0.1 * jax.random.normal(keys[4], (NB, C), dtype=jnp.float32)
    bn_mean = 0.1 * jax.random.normal(keys[5], (NB, C), dtype=jnp.float32)
    bn_var = 0.5 + jnp.abs(jax.random.normal(keys[6], (NB, C), dtype=jnp.float32))

    # Fold BN (eval mode) + conv bias into per-block weight scale and shift:
    #   scale[co]                = gamma[co] / sqrt(var[co] + eps)
    #   w_folded[idx, k, ci, co] = conv_w[idx, co, ci, k] * scale[co]
    #   b_folded[idx, co]        = (conv_b - mean) * scale + beta
    scale = bn_gamma / jnp.sqrt(bn_var + EPS)                     # (NB, C)
    w_folded = jnp.transpose(conv_w, (0, 3, 2, 1)) * scale[:, None, None, :]
    b_folded = (conv_b - bn_mean) * scale + bn_beta

    ref = reference_forward(
        x, conv_w, conv_b, bn_gamma, bn_beta, bn_mean, bn_var,
        num_stages=NUM_STAGES, blocks_per_stage=BLOCKS_PER_STAGE,
        filter_size=F, eps=EPS)
    ref = jax.block_until_ready(ref)

    # f32 MXU operands: tight check against the reference.
    out_f32 = conv1d_group_pallas(
        x, w_folded, b_folded,
        num_stages=NUM_STAGES, blocks_per_stage=BLOCKS_PER_STAGE,
        filter_size=F, matmul_dtype=jnp.float32)
    out_f32 = jax.block_until_ready(out_f32)
    assert out_f32.shape == (B, C, L - NUM_STAGES * (2 * F - 2)), out_f32.shape
    assert jnp.allclose(out_f32, ref, rtol=1e-3, atol=1e-3), \
        float(jnp.max(jnp.abs(out_f32 - ref)))

    # bf16 MXU operands (the default; MXU-native on v5e/v6e/v7x).  Accumulation
    # stays f32; tolerance is loose and grows with the number of chained blocks
    # and residual adds (here 4 blocks over 2 stages).
    out_bf16 = conv1d_group_pallas(
        x, w_folded, b_folded,
        num_stages=NUM_STAGES, blocks_per_stage=BLOCKS_PER_STAGE,
        filter_size=F)
    out_bf16 = jax.block_until_ready(out_bf16)
    assert out_bf16.shape == out_f32.shape, out_bf16.shape
    assert jnp.allclose(out_bf16, ref, rtol=2.5e-1, atol=2.5e-1), \
        float(jnp.max(jnp.abs(out_bf16 - ref)))

    print("KERNEL_OK")
</pallas_src>

<mosaic_0001>
module attributes {stable_mosaic.version = 11 : i64} {
  func.func @_conv_group_kernel(%arg0: i32, %arg1: memref<2x48x128xf32, #tpu.memory_space<vmem>>, %arg2: memref<4x3x128x128xf32, #tpu.memory_space<vmem>>, %arg3: memref<4x128xf32, #tpu.memory_space<vmem>>, %arg4: memref<2x40x128xf32, #tpu.memory_space<vmem>>, %arg5: memref<104x128xf32, #tpu.memory_space<vmem>>) attributes {dimension_semantics = [#tpu.dimension_semantics<parallel>], iteration_bounds = array<i64: 2>, scalar_prefetch = 0 : i64, scratch_operands = 1 : i64, tpu.core_type = #tpu.core_type<tc>, window_params = [{transform_indices = @transform_0, window_bounds = array<i64: 2, 48, 128>}, {pipeline_mode = #tpu.pipeline_mode<synchronous>, transform_indices = @transform_1, window_bounds = array<i64: 4, 3, 128, 128>}, {pipeline_mode = #tpu.pipeline_mode<synchronous>, transform_indices = @transform_2, window_bounds = array<i64: 4, 128>}, {transform_indices = @transform_3, window_bounds = array<i64: 2, 40, 128>}]} {
    %cst = arith.constant 0.000000e+00 : f32
    %0 = vector.broadcast %cst : f32 to vector<8x128xf32>
    %c96 = arith.constant 96 : index
    %c0 = arith.constant 0 : index
    %1 = vector.load %arg5[%c96, %c0] : memref<104x128xf32, #tpu.memory_space<vmem>>, vector<8x128xf32>
    tpu.vector_store %arg5[%c96, %c0], %0 {strides = array<i32>} : memref<104x128xf32, #tpu.memory_space<vmem>>, vector<8x128xf32>,
    %c0_0 = arith.constant 0 : index
    %c0_1 = arith.constant 0 : index
    %c0_2 = arith.constant 0 : index
    %2 = vector.load %arg1[%c0_0, %c0_1, %c0_2] : memref<2x48x128xf32, #tpu.memory_space<vmem>>, vector<2x48x128xf32>
    %3 = vector.shape_cast %2 : vector<2x48x128xf32> to vector<96x128xf32>
    %c0_3 = arith.constant 0 : index
    %c0_4 = arith.constant 0 : index
    %4 = vector.load %arg5[%c0_3, %c0_4] : memref<104x128xf32, #tpu.memory_space<vmem>>, vector<96x128xf32>
    tpu.vector_store %arg5[%c0_3, %c0_4], %3 {strides = array<i32>} : memref<104x128xf32, #tpu.memory_space<vmem>>, vector<96x128xf32>,
    %c0_5 = arith.constant 0 : index
    %c0_6 = arith.constant 0 : index
    %5 = vector.load %arg5[%c0_5, %c0_6] : memref<104x128xf32, #tpu.memory_space<vmem>>, vector<96x128xf32>
    %c0_7 = arith.constant 0 : index
    %c0_8 = arith.constant 0 : index
    %c0_9 = arith.constant 0 : index
    %c0_10 = arith.constant 0 : index
    %6 = vector.load %arg2[%c0_7, %c0_8, %c0_9, %c0_10] : memref<4x3x128x128xf32, #tpu.memory_space<vmem>>, vector<1x1x128x128xf32>
    %7 = vector.shape_cast %6 : vector<1x1x128x128xf32> to vector<128x128xf32>
    %cst_11 = arith.constant dense<0.000000e+00> : vector<96x128xf32>
    %8 = tpu.matmul %5, %7, %cst_11 {dimension_numbers = #tpu.dot_dimension_numbers<[1], [0], [0], [1], [0, 0, 1, 1], [], []>} : vector<96x128xf32>, vector<128x128xf32>, vector<96x128xf32> -> vector<96x128xf32>
    %c1 = arith.constant 1 : index
    %c0_12 = arith.constant 0 : index
    %9 = vector.load %arg5[%c1, %c0_12] : memref<104x128xf32, #tpu.memory_space<vmem>>, vector<96x128xf32>
    %c0_13 = arith.constant 0 : index
    %c1_14 = arith.constant 1 : index
    %c0_15 = arith.constant 0 : index
    %c0_16 = arith.constant 0 : index
    %10 = vector.load %arg2[%c0_13, %c1_14, %c0_15, %c0_16] : memref<4x3x128x128xf32, #tpu.memory_space<vmem>>, vector<1x1x128x128xf32>
    %11 = vector.shape_cast %10 : vector<1x1x128x128xf32> to vector<128x128xf32>
    %cst_17 = arith.constant dense<0.000000e+00> : vector<96x128xf32>
    %12 = tpu.matmul %9, %11, %cst_17 {dimension_numbers = #tpu.dot_dimension_numbers<[1], [0], [0], [1], [0, 0, 1, 1], [], []>} : vector<96x128xf32>, vector<128x128xf32>, vector<96x128xf32> -> vector<96x128xf32>
    %13 = arith.addf %8, %12 : vector<96x128xf32>
    %c2 = arith.constant 2 : index
    %c0_18 = arith.constant 0 : index
    %14 = vector.load %arg5[%c2, %c0_18] : memref<104x128xf32, #tpu.memory_space<vmem>>, vector<96x128xf32>
    %c0_19 = arith.constant 0 : index
    %c2_20 = arith.constant 2 : index
    %c0_21 = arith.constant 0 : index
    %c0_22 = arith.constant 0 : index
    %15 = vector.load %arg2[%c0_19, %c2_20, %c0_21, %c0_22] : memref<4x3x128x128xf32, #tpu.memory_space<vmem>>, vector<1x1x128x128xf32>
    %16 = vector.shape_cast %15 : vector<1x1x128x128xf32> to vector<128x128xf32>
    %cst_23 = arith.constant dense<0.000000e+00> : vector<96x128xf32>
    %17 = tpu.matmul %14, %16, %cst_23 {dimension_numbers = #tpu.dot_dimension_numbers<[1], [0], [0], [1], [0, 0, 1, 1], [], []>} : vector<96x128xf32>, vector<128x128xf32>, vector<96x128xf32> -> vector<96x128xf32>
    %18 = arith.addf %13, %17 : vector<96x128xf32>
    %c0_24 = arith.constant 0 : index
    %c0_25 = arith.constant 0 : index
    %19 = vector.load %arg3[%c0_24, %c0_25] : memref<4x128xf32, #tpu.memory_space<vmem>>, vector<1x128xf32>
    %20 = vector.shape_cast %19 : vector<1x128xf32> to vector<128xf32>
    %21 = vector.shape_cast %20 : vector<128xf32> to vector<1x128xf32>
    %22 = vector.broadcast %21 : vector<1x128xf32> to vector<96x128xf32>
    %23 = arith.addf %18, %22 : vector<96x128xf32>
    %cst_26 = arith.constant 0.000000e+00 : f32
    %24 = vector.broadcast %cst_26 : f32 to vector<96x128xf32>
    %25 = arith.maximumf %23, %24 : vector<96x128xf32>
    %c0_27 = arith.constant 0 : index
    %c0_28 = arith.constant 0 : index
    %26 = vector.load %arg5[%c0_27, %c0_28] : memref<104x128xf32, #tpu.memory_space<vmem>>, vector<96x128xf32>
    tpu.vector_store %arg5[%c0_27, %c0_28], %25 {strides = array<i32>} : memref<104x128xf32, #tpu.memory_space<vmem>>, vector<96x128xf32>,
    %c0_29 = arith.constant 0 : index
    %c0_30 = arith.constant 0 : index
    %27 = vector.load %arg5[%c0_29, %c0_30] : memref<104x128xf32, #tpu.memory_space<vmem>>, vector<96x128xf32>
    %c1_31 = arith.constant 1 : index
    %c0_32 = arith.constant 0 : index
    %c0_33 = arith.constant 0 : index
    %c0_34 = arith.constant 0 : index
    %28 = vector.load %arg2[%c1_31, %c0_32, %c0_33, %c0_34] : memref<4x3x128x128xf32, #tpu.memory_space<vmem>>, vector<1x1x128x128xf32>
    %29 = vector.shape_cast %28 : vector<1x1x128x128xf32> to vector<128x128xf32>
    %cst_35 = arith.constant dense<0.000000e+00> : vector<96x128xf32>
    %30 = tpu.matmul %27, %29, %cst_35 {dimension_numbers = #tpu.dot_dimension_numbers<[1], [0], [0], [1], [0, 0, 1, 1], [], []>} : vector<96x128xf32>, vector<128x128xf32>, vector<96x128xf32> -> vector<96x128xf32>
    %c1_36 = arith.constant 1 : index
    %c0_37 = arith.constant 0 : index
    %31 = vector.load %arg5[%c1_36, %c0_37] : memref<104x128xf32, #tpu.memory_space<vmem>>, vector<96x128xf32>
    %c1_38 = arith.constant 1 : index
    %c1_39 = arith.constant 1 : index
    %c0_40 = arith.constant 0 : index
    %c0_41 = arith.constant 0 : index
    %32 = vector.load %arg2[%c1_38, %c1_39, %c0_40, %c0_41] : memref<4x3x128x128xf32, #tpu.memory_space<vmem>>, vector<1x1x128x128xf32>
    %33 = vector.shape_cast %32 : vector<1x1x128x128xf32> to vector<128x128xf32>
    %cst_42 = arith.constant dense<0.000000e+00> : vector<96x128xf32>
    %34 = tpu.matmul %31, %33, %cst_42 {dimension_numbers = #tpu.dot_dimension_numbers<[1], [0], [0], [1], [0, 0, 1, 1], [], []>} : vector<96x128xf32>, vector<128x128xf32>, vector<96x128xf32> -> vector<96x128xf32>
    %35 = arith.addf %30, %34 : vector<96x128xf32>
    %c2_43 = arith.constant 2 : index
    %c0_44 = arith.constant 0 : index
    %36 = vector.load %arg5[%c2_43, %c0_44] : memref<104x128xf32, #tpu.memory_space<vmem>>, vector<96x128xf32>
    %c1_45 = arith.constant 1 : index
    %c2_46 = arith.constant 2 : index
    %c0_47 = arith.constant 0 : index
    %c0_48 = arith.constant 0 : index
    %37 = vector.load %arg2[%c1_45, %c2_46, %c0_47, %c0_48] : memref<4x3x128x128xf32, #tpu.memory_space<vmem>>, vector<1x1x128x128xf32>
    %38 = vector.shape_cast %37 : vector<1x1x128x128xf32> to vector<128x128xf32>
    %cst_49 = arith.constant dense<0.000000e+00> : vector<96x128xf32>
    %39 = tpu.matmul %36, %38, %cst_49 {dimension_numbers = #tpu.dot_dimension_numbers<[1], [0], [0], [1], [0, 0, 1, 1], [], []>} : vector<96x128xf32>, vector<128x128xf32>, vector<96x128xf32> -> vector<96x128xf32>
    %40 = arith.addf %35, %39 : vector<96x128xf32>
    %c1_50 = arith.constant 1 : index
    %c0_51 = arith.constant 0 : index
    %41 = vector.load %arg3[%c1_50, %c0_51] : memref<4x128xf32, #tpu.memory_space<vmem>>, vector<1x128xf32>
    %42 = vector.shape_cast %41 : vector<1x128xf32> to vector<128xf32>
    %43 = vector.shape_cast %42 : vector<128xf32> to vector<1x128xf32>
    %44 = vector.broadcast %43 : vector<1x128xf32> to vector<96x128xf32>
    %45 = arith.addf %40, %44 : vector<96x128xf32>
    %cst_52 = arith.constant 0.000000e+00 : f32
    %46 = vector.broadcast %cst_52 : f32 to vector<96x128xf32>
    %47 = arith.maximumf %45, %46 : vector<96x128xf32>
    %48 = arith.addf %47, %3 : vector<96x128xf32>
    %c0_53 = arith.constant 0 : index
    %c0_54 = arith.constant 0 : index
    %49 = vector.load %arg5[%c0_53, %c0_54] : memref<104x128xf32, #tpu.memory_space<vmem>>, vector<96x128xf32>
    tpu.vector_store %arg5[%c0_53, %c0_54], %48 {strides = array<i32>} : memref<104x128xf32, #tpu.memory_space<vmem>>, vector<96x128xf32>,
    %c0_55 = arith.constant 0 : index
    %c0_56 = arith.constant 0 : index
    %50 = vector.load %arg5[%c0_55, %c0_56] : memref<104x128xf32, #tpu.memory_space<vmem>>, vector<96x128xf32>
    %c2_57 = arith.constant 2 : index
    %c0_58 = arith.constant 0 : index
    %c0_59 = arith.constant 0 : index
    %c0_60 = arith.constant 0 : index
    %51 = vector.load %arg2[%c2_57, %c0_58, %c0_59, %c0_60] : memref<4x3x128x128xf32, #tpu.memory_space<vmem>>, vector<1x1x128x128xf32>
    %52 = vector.shape_cast %51 : vector<1x1x128x128xf32> to vector<128x128xf32>
    %cst_61 = arith.constant dense<0.000000e+00> : vector<96x128xf32>
    %53 = tpu.matmul %50, %52, %cst_61 {dimension_numbers = #tpu.dot_dimension_numbers<[1], [0], [0], [1], [0, 0, 1, 1], [], []>} : vector<96x128xf32>, vector<128x128xf32>, vector<96x128xf32> -> vector<96x128xf32>
    %c1_62 = arith.constant 1 : index
    %c0_63 = arith.constant 0 : index
    %54 = vector.load %arg5[%c1_62, %c0_63] : memref<104x128xf32, #tpu.memory_space<vmem>>, vector<96x128xf32>
    %c2_64 = arith.constant 2 : index
    %c1_65 = arith.constant 1 : index
    %c0_66 = arith.constant 0 : index
    %c0_67 = arith.constant 0 : index
    %55 = vector.load %arg2[%c2_64, %c1_65, %c0_66, %c0_67] : memref<4x3x128x128xf32, #tpu.memory_space<vmem>>, vector<1x1x128x128xf32>
    %56 = vector.shape_cast %55 : vector<1x1x128x128xf32> to vector<128x128xf32>
    %cst_68 = arith.constant dense<0.000000e+00> : vector<96x128xf32>
    %57 = tpu.matmul %54, %56, %cst_68 {dimension_numbers = #tpu.dot_dimension_numbers<[1], [0], [0], [1], [0, 0, 1, 1], [], []>} : vector<96x128xf32>, vector<128x128xf32>, vector<96x128xf32> -> vector<96x128xf32>
    %58 = arith.addf %53, %57 : vector<96x128xf32>
    %c2_69 = arith.constant 2 : index
    %c0_70 = arith.constant 0 : index
    %59 = vector.load %arg5[%c2_69, %c0_70] : memref<104x128xf32, #tpu.memory_space<vmem>>, vector<96x128xf32>
    %c2_71 = arith.constant 2 : index
    %c2_72 = arith.constant 2 : index
    %c0_73 = arith.constant 0 : index
    %c0_74 = arith.constant 0 : index
    %60 = vector.load %arg2[%c2_71, %c2_72, %c0_73, %c0_74] : memref<4x3x128x128xf32, #tpu.memory_space<vmem>>, vector<1x1x128x128xf32>
    %61 = vector.shape_cast %60 : vector<1x1x128x128xf32> to vector<128x128xf32>
    %cst_75 = arith.constant dense<0.000000e+00> : vector<96x128xf32>
    %62 = tpu.matmul %59, %61, %cst_75 {dimension_numbers = #tpu.dot_dimension_numbers<[1], [0], [0], [1], [0, 0, 1, 1], [], []>} : vector<96x128xf32>, vector<128x128xf32>, vector<96x128xf32> -> vector<96x128xf32>
    %63 = arith.addf %58, %62 : vector<96x128xf32>
    %c2_76 = arith.constant 2 : index
    %c0_77 = arith.constant 0 : index
    %64 = vector.load %arg3[%c2_76, %c0_77] : memref<4x128xf32, #tpu.memory_space<vmem>>, vector<1x128xf32>
    %65 = vector.shape_cast %64 : vector<1x128xf32> to vector<128xf32>
    %66 = vector.shape_cast %65 : vector<128xf32> to vector<1x128xf32>
    %67 = vector.broadcast %66 : vector<1x128xf32> to vector<96x128xf32>
    %68 = arith.addf %63, %67 : vector<96x128xf32>
    %cst_78 = arith.constant 0.000000e+00 : f32
    %69 = vector.broadcast %cst_78 : f32 to vector<96x128xf32>
    %70 = arith.maximumf %68, %69 : vector<96x128xf32>
    %c0_79 = arith.constant 0 : index
    %c0_80 = arith.constant 0 : index
    %71 = vector.load %arg5[%c0_79, %c0_80] : memref<104x128xf32, #tpu.memory_space<vmem>>, vector<96x128xf32>
    tpu.vector_store %arg5[%c0_79, %c0_80], %70 {strides = array<i32>} : memref<104x128xf32, #tpu.memory_space<vmem>>, vector<96x128xf32>,
    %c0_81 = arith.constant 0 : index
    %c0_82 = arith.constant 0 : index
    %72 = vector.load %arg5[%c0_81, %c0_82] : memref<104x128xf32, #tpu.memory_space<vmem>>, vector<96x128xf32>
    %c3 = arith.constant 3 : index
    %c0_83 = arith.constant 0 : index
    %c0_84 = arith.constant 0 : index
    %c0_85 = arith.constant 0 : index
    %73 = vector.load %arg2[%c3, %c0_83, %c0_84, %c0_85] : memref<4x3x128x128xf32, #tpu.memory_space<vmem>>, vector<1x1x128x128xf32>
    %74 = vector.shape_cast %73 : vector<1x1x128x128xf32> to vector<128x128xf32>
    %cst_86 = arith.constant dense<0.000000e+00> : vector<96x128xf32>
    %75 = tpu.matmul %72, %74, %cst_86 {dimension_numbers = #tpu.dot_dimension_numbers<[1], [0], [0], [1], [0, 0, 1, 1], [], []>} : vector<96x128xf32>, vector<128x128xf32>, vector<96x128xf32> -> vector<96x128xf32>
    %c1_87 = arith.constant 1 : index
    %c0_88 = arith.constant 0 : index
    %76 = vector.load %arg5[%c1_87, %c0_88] : memref<104x128xf32, #tpu.memory_space<vmem>>, vector<96x128xf32>
    %c3_89 = arith.constant 3 : index
    %c1_90 = arith.constant 1 : index
    %c0_91 = arith.constant 0 : index
    %c0_92 = arith.constant 0 : index
    %77 = vector.load %arg2[%c3_89, %c1_90, %c0_91, %c0_92] : memref<4x3x128x128xf32, #tpu.memory_space<vmem>>, vector<1x1x128x128xf32>
    %78 = vector.shape_cast %77 : vector<1x1x128x128xf32> to vector<128x128xf32>
    %cst_93 = arith.constant dense<0.000000e+00> : vector<96x128xf32>
    %79 = tpu.matmul %76, %78, %cst_93 {dimension_numbers = #tpu.dot_dimension_numbers<[1], [0], [0], [1], [0, 0, 1, 1], [], []>} : vector<96x128xf32>, vector<128x128xf32>, vector<96x128xf32> -> vector<96x128xf32>
    %80 = arith.addf %75, %79 : vector<96x128xf32>
    %c2_94 = arith.constant 2 : index
    %c0_95 = arith.constant 0 : index
    %81 = vector.load %arg5[%c2_94, %c0_95] : memref<104x128xf32, #tpu.memory_space<vmem>>, vector<96x128xf32>
    %c3_96 = arith.constant 3 : index
    %c2_97 = arith.constant 2 : index
    %c0_98 = arith.constant 0 : index
    %c0_99 = arith.constant 0 : index
    %82 = vector.load %arg2[%c3_96, %c2_97, %c0_98, %c0_99] : memref<4x3x128x128xf32, #tpu.memory_space<vmem>>, vector<1x1x128x128xf32>
    %83 = vector.shape_cast %82 : vector<1x1x128x128xf32> to vector<128x128xf32>
    %cst_100 = arith.constant dense<0.000000e+00> : vector<96x128xf32>
    %84 = tpu.matmul %81, %83, %cst_100 {dimension_numbers = #tpu.dot_dimension_numbers<[1], [0], [0], [1], [0, 0, 1, 1], [], []>} : vector<96x128xf32>, vector<128x128xf32>, vector<96x128xf32> -> vector<96x128xf32>
    %85 = arith.addf %80, %84 : vector<96x128xf32>
    %c3_101 = arith.constant 3 : index
    %c0_102 = arith.constant 0 : index
    %86 = vector.load %arg3[%c3_101, %c0_102] : memref<4x128xf32, #tpu.memory_space<vmem>>, vector<1x128xf32>
    %87 = vector.shape_cast %86 : vector<1x128xf32> to vector<128xf32>
    %88 = vector.shape_cast %87 : vector<128xf32> to vector<1x128xf32>
    %89 = vector.broadcast %88 : vector<1x128xf32> to vector<96x128xf32>
    %90 = arith.addf %85, %89 : vector<96x128xf32>
    %cst_103 = arith.constant 0.000000e+00 : f32
    %91 = vector.broadcast %cst_103 : f32 to vector<96x128xf32>
    %92 = arith.maximumf %90, %91 : vector<96x128xf32>
    %93 = arith.addf %92, %48 : vector<96x128xf32>
    %94 = vector.shape_cast %93 : vector<96x128xf32> to vector<2x48x128xf32>
    %95 = vector.extract_strided_slice %94 {offsets = [0, 0, 0], sizes = [2, 40, 128], strides = [1, 1, 1]} : vector<2x48x128xf32> to vector<2x40x128xf32>
    %c0_104 = arith.constant 0 : index
    %c0_105 = arith.constant 0 : index
    %c0_106 = arith.constant 0 : index
    %96 = vector.load %arg4[%c0_104, %c0_105, %c0_106] : memref<2x40x128xf32, #tpu.memory_space<vmem>>, vector<2x40x128xf32>
    tpu.vector_store %arg4[%c0_104, %c0_105, %c0_106], %95 {strides = array<i32>} : memref<2x40x128xf32, #tpu.memory_space<vmem>>, vector<2x40x128xf32>,
    return
  }
  func.func @transform_0(%arg0: i32) -> (i32, i32, i32) {
    %c0_i32 = arith.constant 0 : i32
    %c0_i32_0 = arith.constant 0 : i32
    %c0_i32_1 = arith.constant 0 : i32
    return %arg0, %c0_i32, %c0_i32_0 : i32, i32, i32
  }
  func.func @transform_1(%arg0: i32) -> (i32, i32, i32, i32) {
    %c0_i32 = arith.constant 0 : i32
    %c0_i32_0 = arith.constant 0 : i32
    %c0_i32_1 = arith.constant 0 : i32
    %c0_i32_2 = arith.constant 0 : i32
    %c0_i32_3 = arith.constant 0 : i32
    return %c0_i32, %c0_i32_0, %c0_i32_1, %c0_i32_2 : i32, i32, i32, i32
  }
  func.func @transform_2(%arg0: i32) -> (i32, i32) {
    %c0_i32 = arith.constant 0 : i32
    %c0_i32_0 = arith.constant 0 : i32
    %c0_i32_1 = arith.constant 0 : i32
    return %c0_i32, %c0_i32_0 : i32, i32
  }
  func.func @transform_3(%arg0: i32) -> (i32, i32, i32) {
    %c0_i32 = arith.constant 0 : i32
    %c0_i32_0 = arith.constant 0 : i32
    %c0_i32_1 = arith.constant 0 : i32
    return %arg0, %c0_i32, %c0_i32_0 : i32, i32, i32
  }
}

</mosaic_0001>

<llo_original>
// kernel: tpu_custom_call.1
$region0: #{tpu_custom_call.1}
  #allocation0 [shape = 'u32[]', space=smem, size = 0x4, offset = 0x4, fixed_abs, tag = 'smem constant byte address 0x4 - core index']
  #allocation1 [shape = 'u32[72,128]{1,0:T(1,128)}', space=vmem, size = 0x9000, scoped, tag = 'internal scratch']
  #allocation2 [shape = 'f32[104,128]{1,0:T(8,128)}', space=vmem, size = 0xd000, scoped, tag = 'scratch operand']
  %s0 = inlined_call_operand.hbm [shape: f32[4,48,128], index: 0, kind: input, shape index: {}]
  %s1 = inlined_call_operand.hbm [shape: f32[4,3,128,128], index: 1, kind: input, shape index: {}]
  %s2 = inlined_call_operand.hbm [shape: f32[4,128], index: 2, kind: input, shape index: {}]
  %s3 = inlined_call_operand.hbm [shape: f32[4,40,128], index: 3, kind: output, shape index: {}]
  %s4 = sld [smem:[#allocation0]]
  $region57: #{tpu_custom_call.1} parent=0
    _
  %s6 = ssub.s32 1, %s4
  %s7 = scalar_select 0, %s6, %s4
  $region1: #{tpu_custom_call.1} parent=0
    #allocation3 [shape = 'u8[98304]{0}', space=vmem, size = 0x18000, scoped, tag = 'input window, operand 0']
    #allocation4 [shape = 's32[2]{0}', space=sflag, size = 0x8, scoped, tag = 'scoped memory for tpu_custom_call.1']
    #allocation5 [shape = 's32[2]{0}', space=sflag, size = 0x8, scoped, tag = 'scoped memory for tpu_custom_call.1']
    #allocation6 [shape = 'u8[786432]{0}', space=vmem, size = 0xc0000, scoped, tag = 'input window, operand 1, single buffered']
    #allocation7 [shape = 's32[1]{0}', space=sflag, size = 0x4, scoped, tag = 'scoped memory for tpu_custom_call.1']
    #allocation8 [shape = 'u8[2048]{0}', space=vmem, size = 0x800, scoped, tag = 'input window, operand 2, single buffered']
    #allocation9 [shape = 'u8[81920]{0}', space=vmem, size = 0x14000, scoped, tag = 'output window, operand 0']
    %8 = vsyncpa [#allocation4], 0
    %s9 = scalar_lea.sflag [#allocation4], 1
    %10 = vsyncpa %s9, 0
    %11 = vsyncpa [#allocation7], 0
    %12 = vsyncpa [#allocation5], 0
    %s13 = scalar_lea.sflag [#allocation5], 1
    %14 = vsyncpa %s13, 0
    loop: start=0, step=1, limit=4
    $region2: #{tpu_custom_call.1} parent=1 // loop_pre_header
      _
    $region3: #{tpu_custom_call.1} parent=1 // loop_header
      %s16 = sphi 0, %s20
      %p17 = scmp.ge.s32.totalorder %s16, 4
      %s26 = sphi 0, %s28
      %s29 = sphi 0, %s26
      %s30 = sphi 0, %s29
      %s46 = sphi 0, %s30
      %s50 = sphi 0, %s50
      %s52 = sphi 0, %s50
      %s53 = sphi 0, %s52
      %s67 = sphi 0, %s53
      %s71 = sphi 0, %s71
      %s73 = sphi 0, %s71
      %s74 = sphi 0, %s73
      %s88 = sphi 0, %s74
      %s94 = sphi 0, %s96
      %s97 = sphi 0, %s94
      %s98 = sphi 0, %s97
      %s114 = sphi 0, %s98
    $region4: #{tpu_custom_call.1} parent=1 // loop_header_branch
      %19 = sbr.rel (%p17) target = $region8
    $region5: #{tpu_custom_call.1} parent=1 // loop_body
      %s21 = ssub.s32 %s16, 1
      %s22 = ssub.s32 %s16, 2
      %s23 = sadd.s32 %s16, 1
      %s24 = ssub.s32 %s16, %s23
      %p25 = scmp.eq.s32.totalorder %s24, 0
      %s27 = sadd.s32 %s26, 1
      %s28 = scalar_select %p25, %s26, %s27
      %p31 = pneg %p25
      %p32 = scmp.eq.s32.totalorder %s16, 1
      %p33 = por %p31, %p32
      %p34 = scmp.ne.s32.totalorder %s26, %s29
      %p35 = scmp.eq.s32.totalorder %s16, 0
      %p36 = por %p34, %p35
      %p37 = scmp.ne.s32.totalorder %s26, %s29
      %p38 = scmp.eq.s32.totalorder %s21, 1
      %p39 = por %p37, %p38
      %p40 = scmp.ne.s32.totalorder %s29, %s30
      %p41 = scmp.eq.s32.totalorder %s21, 0
      %p42 = por %p40, %p41
      %p43 = scmp.ne.s32.totalorder %s29, %s30
      %p44 = scmp.eq.s32.totalorder %s22, 1
      %p45 = por %p43, %p44
      %p47 = scmp.ne.s32.totalorder %s30, %s46
      %p48 = scmp.eq.s32.totalorder %s22, 0
      %p49 = por %p47, %p48
      %s51 = sadd.s32 %s50, 1
      %p54 = scmp.eq.s32.totalorder %s16, 1
      %p55 = scmp.ne.s32.totalorder %s50, %s52
      %p56 = scmp.eq.s32.totalorder %s16, 0
      %p57 = por %p55, %p56
      %p58 = scmp.ne.s32.totalorder %s50, %s52
      %p59 = scmp.eq.s32.totalorder %s21, 1
      %p60 = por %p58, %p59
      %p61 = scmp.ne.s32.totalorder %s52, %s53
      %p62 = scmp.eq.s32.totalorder %s21, 0
      %p63 = por %p61, %p62
      %p64 = scmp.ne.s32.totalorder %s52, %s53
      %p65 = scmp.eq.s32.totalorder %s22, 1
      %p66 = por %p64, %p65
      %p68 = scmp.ne.s32.totalorder %s53, %s67
      %p69 = scmp.eq.s32.totalorder %s22, 0
      %p70 = por %p68, %p69
      %s72 = sadd.s32 %s71, 1
      %p75 = scmp.eq.s32.totalorder %s16, 1
      %p76 = scmp.ne.s32.totalorder %s71, %s73
      %p77 = scmp.eq.s32.totalorder %s16, 0
      %p78 = por %p76, %p77
      %p79 = scmp.ne.s32.totalorder %s71, %s73
      %p80 = scmp.eq.s32.totalorder %s21, 1
      %p81 = por %p79, %p80
      %p82 = scmp.ne.s32.totalorder %s73, %s74
      %p83 = scmp.eq.s32.totalorder %s21, 0
      %p84 = por %p82, %p83
      %p85 = scmp.ne.s32.totalorder %s73, %s74
      %p86 = scmp.eq.s32.totalorder %s22, 1
      %p87 = por %p85, %p86
      %p89 = scmp.ne.s32.totalorder %s74, %s88
      %p90 = scmp.eq.s32.totalorder %s22, 0
      %p91 = por %p89, %p90
      %s92 = ssub.s32 %s16, %s23
      %p93 = scmp.eq.s32.totalorder %s92, 0
      %s95 = sadd.s32 %s94, 1
      %s96 = scalar_select %p93, %s94, %s95
      %p99 = pneg %p93
      %p100 = scmp.eq.s32.totalorder %s16, 1
      %p101 = por %p99, %p100
      %p102 = scmp.ne.s32.totalorder %s94, %s97
      %p103 = scmp.eq.s32.totalorder %s16, 0
      %p104 = por %p102, %p103
      %p105 = scmp.ne.s32.totalorder %s94, %s97
      %p106 = scmp.eq.s32.totalorder %s21, 1
      %p107 = por %p105, %p106
      %p108 = scmp.ne.s32.totalorder %s97, %s98
      %p109 = scmp.eq.s32.totalorder %s21, 0
      %p110 = por %p108, %p109
      %p111 = scmp.ne.s32.totalorder %s97, %s98
      %p112 = scmp.eq.s32.totalorder %s22, 1
      %p113 = por %p111, %p112
      %p115 = scmp.ne.s32.totalorder %s98, %s114
      %p116 = scmp.eq.s32.totalorder %s22, 0
      %p117 = por %p115, %p116
      %p118 = scmp.le.s32.totalorder 1, %s16
      %p119 = scmp.lt.s32.totalorder %s16, 3
      %p120 = pnand %p118, %p119
      %p121 = pneg %p120
      // Predicated region
      $region9: #{tpu_custom_call.1} parent=5 // pred_check
        _
      $region10: #{tpu_custom_call.1} parent=5 // pred_check_branch
        %123 = sbr.rel (%p120) target = $region12
      $region11: #{tpu_custom_call.1} parent=5 // pred_region
        %s124 = ssub.s32 %s16, 1
        // Predicated region
        $region13: #{tpu_custom_call.1} parent=11 // pred_check
          %p125 = pneg %p63
        $region14: #{tpu_custom_call.1} parent=11 // pred_check_branch
          %127 = sbr.rel (%p125) target = $region16
        $region15: #{tpu_custom_call.1} parent=11 // pred_region
          %129 = vsyncadd [#allocation7], 0
          %s130 = sshll.u32 %s1, 4
          %s131 = int_to_ptr.hbm [resolvable:$true] %s130
          %s132 = sshll.u32 [#allocation6], 4
          %s133 = int_to_ptr.vmem [resolvable:$true] %s132
          %138 = dma.hbm_to_vmem [thread:$0]  %s131, 24576, %s133, [#allocation7], 128, 128, 8
        $region16: #{tpu_custom_call.1} parent=11 // pred_fallthru
          _
        // Predicated region
        $region17: #{tpu_custom_call.1} parent=11 // pred_check
          %p139 = pneg %p84
        $region18: #{tpu_custom_call.1} parent=11 // pred_check_branch
          %141 = sbr.rel (%p139) target = $region20
        $region19: #{tpu_custom_call.1} parent=11 // pred_region
          %143 = vsyncadd [#allocation7], 0
          %s145 = sshll.u32 %s2, 4
          %s146 = int_to_ptr.hbm [resolvable:$true] %s145
          %s147 = sshll.u32 [#allocation8], 4
          %s148 = int_to_ptr.vmem [resolvable:$true] %s147
          %150 = dma.hbm_to_vmem [thread:$0]  %s146, 64, %s148, [#allocation7]
        $region20: #{tpu_custom_call.1} parent=11 // pred_fallthru
          _
      $region12: #{tpu_custom_call.1} parent=5 // pred_fallthru
        _
      %p151 = scmp.lt.s32.totalorder %s16, 2
      // Predicated region
      $region21: #{tpu_custom_call.1} parent=5 // pred_check
        %p152 = pneg %p151
      $region22: #{tpu_custom_call.1} parent=5 // pred_check_branch
        %154 = sbr.rel (%p152) target = $region24
      $region23: #{tpu_custom_call.1} parent=5 // pred_region
        // Predicated region
        $region25: #{tpu_custom_call.1} parent=23 // pred_check
          %p155 = pneg %p36
        $region26: #{tpu_custom_call.1} parent=23 // pred_check_branch
          %157 = sbr.rel (%p155) target = $region28
        $region27: #{tpu_custom_call.1} parent=23 // pred_region
          %s158 = sand.u32 %s26, 1
          %s159 = scalar_lea.sflag [#allocation4], %s158
          %s160 = sand.u32 %s26, 1
          %s161 = smul.addr %s160, 96
          %s162 = scalar_lea.vmem [#allocation3], %s161
          %s163 = smul.u32 2, %s16
          %165 = vsyncadd %s159, 0
          %s166 = smul.addr %s163, 6
          %s167 = smul.addr %s166, 8
          %s168 = scalar_lea.hbm %s0, %s167
          %s169 = sshll.u32 %s168, 4
          %s170 = int_to_ptr.hbm [resolvable:$true] %s169
          %s171 = sshll.u32 %s162, 4
          %s172 = int_to_ptr.vmem [resolvable:$true] %s171
          %177 = dma.hbm_to_vmem [thread:$0]  %s170, 1536, %s172, %s159, 128, 128, 8
        $region28: #{tpu_custom_call.1} parent=23 // pred_fallthru
          _
      $region24: #{tpu_custom_call.1} parent=5 // pred_fallthru
        _
      %p178 = scmp.le.s32.totalorder 1, %s16
      %p179 = scmp.lt.s32.totalorder %s16, 3
      %p180 = pnand %p178, %p179
      %p181 = pneg %p180
      // Predicated region
      $region29: #{tpu_custom_call.1} parent=5 // pred_check
        _
      $region30: #{tpu_custom_call.1} parent=5 // pred_check_branch
        %183 = sbr.rel (%p180) target = $region32
      $region31: #{tpu_custom_call.1} parent=5 // pred_region
        %s184 = ssub.s32 %s16, 1
        %s185 = sand.u32 %s29, 1
        %s186 = scalar_lea.sflag [#allocation4], %s185
        %s187 = sand.u32 %s29, 1
        %s188 = smul.addr %s187, 96
        %s189 = scalar_lea.vmem [#allocation3], %s188
        // Predicated region
        $region33: #{tpu_custom_call.1} parent=31 // pred_check
          %p190 = pneg %p42
        $region34: #{tpu_custom_call.1} parent=31 // pred_check_branch
          %192 = sbr.rel (%p190) target = $region36
        $region35: #{tpu_custom_call.1} parent=31 // pred_region
          %194 = dma.done %s186, 1536
        $region36: #{tpu_custom_call.1} parent=31 // pred_fallthru
          _
        // Predicated region
        $region37: #{tpu_custom_call.1} parent=31 // pred_check
          %p195 = pneg %p63
        $region38: #{tpu_custom_call.1} parent=31 // pred_check_branch
          %197 = sbr.rel (%p195) target = $region40
        $region39: #{tpu_custom_call.1} parent=31 // pred_region
          %199 = dma.done [#allocation7], 24576
        $region40: #{tpu_custom_call.1} parent=31 // pred_fallthru
          _
        // Predicated region
        $region41: #{tpu_custom_call.1} parent=31 // pred_check
          %p200 = pneg %p84
        $region42: #{tpu_custom_call.1} parent=31 // pred_check_branch
          %202 = sbr.rel (%p200) target = $region44
        $region43: #{tpu_custom_call.1} parent=31 // pred_region
          %204 = dma.done [#allocation7], 64
        $region44: #{tpu_custom_call.1} parent=31 // pred_fallthru
          _
        %s205 = sand.u32 %s29, 1
        %s206 = scalar_lea.sflag [#allocation4], %s205
        %s207 = sand.u32 %s29, 1
        %s208 = smul.addr %s207, 96
        %s209 = scalar_lea.vmem [#allocation3], %s208
        %p210 = pneg %p42
        %p211 = pneg %p39
        %p212 = pneg %p63
        %p213 = pneg %p60
        %p214 = pneg %p84
        %p215 = pneg %p81
        %p216 = pneg %p110
        %p217 = pneg %p107
        %s218 = sand.u32 %s97, 1
        %s219 = scalar_lea.sflag [#allocation5], %s218
        %s220 = sand.u32 %s97, 1
        %s221 = smul.addr %s220, 80
        %s222 = scalar_lea.vmem [#allocation9], %s221
        %s223 = smul.u32 2, %s21
        %s224 = smul.u32 2, %s21
        %225 = vst [vmem:[#allocation2 + $0x60] sm:$0xff] 0.0
        %v226 = vld [vmem:[%s189] sm:$0xff]
        %v227 = vld [vmem:[%s189 + $0x8] sm:$0xff]
        %v228 = vld [vmem:[%s189 + $0x10] sm:$0xff]
        %v229 = vld [vmem:[%s189 + $0x18] sm:$0xff]
        %v230 = vld [vmem:[%s189 + $0x20] sm:$0xff]
        %v231 = vld [vmem:[%s189 + $0x28] sm:$0xff]
        %v232 = vld [vmem:[%s189 + $0x30] sm:$0xff]
        %v233 = vld [vmem:[%s189 + $0x38] sm:$0xff]
        %v234 = vld [vmem:[%s189 + $0x40] sm:$0xff]
        %v235 = vld [vmem:[%s189 + $0x48] sm:$0xff]
        %v236 = vld [vmem:[%s189 + $0x50] sm:$0xff]
        %v237 = vld [vmem:[%s189 + $0x58] sm:$0xff]
        %238 = vst [vmem:[#allocation2] sm:$0xff] %v226
        %239 = vst [vmem:[#allocation2 + $0x8] sm:$0xff] %v227
        %240 = vst [vmem:[#allocation2 + $0x10] sm:$0xff] %v228
        %241 = vst [vmem:[#allocation2 + $0x18] sm:$0xff] %v229
        %242 = vst [vmem:[#allocation2 + $0x20] sm:$0xff] %v230
        %243 = vst [vmem:[#allocation2 + $0x28] sm:$0xff] %v231
        %244 = vst [vmem:[#allocation2 + $0x30] sm:$0xff] %v232
        %245 = vst [vmem:[#allocation2 + $0x38] sm:$0xff] %v233
        %246 = vst [vmem:[#allocation2 + $0x40] sm:$0xff] %v234
        %247 = vst [vmem:[#allocation2 + $0x48] sm:$0xff] %v235
        %248 = vst [vmem:[#allocation2 + $0x50] sm:$0xff] %v236
        %249 = vst [vmem:[#allocation2 + $0x58] sm:$0xff] %v237
        %v250 = vld [vmem:[#allocation2] sm:$0xff]
        %v251 = vld [vmem:[#allocation2 + $0x8] sm:$0xff]
        %v252 = vld [vmem:[#allocation2 + $0x10] sm:$0xff]
        %v253 = vld [vmem:[#allocation2 + $0x18] sm:$0xff]
        %v254 = vld [vmem:[#allocation2 + $0x20] sm:$0xff]
        %v255 = vld [vmem:[#allocation2 + $0x28] sm:$0xff]
        %v256 = vld [vmem:[#allocation2 + $0x30] sm:$0xff]
        %v257 = vld [vmem:[#allocation2 + $0x38] sm:$0xff]
        %v258 = vld [vmem:[#allocation2 + $0x40] sm:$0xff]
        %v259 = vld [vmem:[#allocation2 + $0x48] sm:$0xff]
        %v260 = vld [vmem:[#allocation2 + $0x50] sm:$0xff]
        %v261 = vld [vmem:[#allocation2 + $0x58] sm:$0xff]
        %v262 = vld [vmem:[#allocation6] sm:$0xff]
        %v263 = vld [vmem:[#allocation6 + $0x8] sm:$0xff]
        %v264 = vld [vmem:[#allocation6 + $0x10] sm:$0xff]
        %v265 = vld [vmem:[#allocation6 + $0x18] sm:$0xff]
        %v266 = vld [vmem:[#allocation6 + $0x20] sm:$0xff]
        %v267 = vld [vmem:[#allocation6 + $0x28] sm:$0xff]
        %v268 = vld [vmem:[#allocation6 + $0x30] sm:$0xff]
        %v269 = vld [vmem:[#allocation6 + $0x38] sm:$0xff]
        %v270 = vld [vmem:[#allocation6 + $0x40] sm:$0xff]
        %v271 = vld [vmem:[#allocation6 + $0x48] sm:$0xff]
        %v272 = vld [vmem:[#allocation6 + $0x50] sm:$0xff]
        %v273 = vld [vmem:[#allocation6 + $0x58] sm:$0xff]
        %v274 = vld [vmem:[#allocation6 + $0x60] sm:$0xff]
        %v275 = vld [vmem:[#allocation6 + $0x68] sm:$0xff]
        %v276 = vld [vmem:[#allocation6 + $0x70] sm:$0xff]
        %v277 = vld [vmem:[#allocation6 + $0x78] sm:$0xff]
        %v278 = vld [vmem:[#allocation2 + $0x1] sm:$0xff]
        %v279 = vld [vmem:[#allocation2 + $0x9] sm:$0xff]
        %v280 = vld [vmem:[#allocation2 + $0x11] sm:$0xff]
        %v281 = vld [vmem:[#allocation2 + $0x19] sm:$0xff]
        %v282 = vld [vmem:[#allocation2 + $0x21] sm:$0xff]
        %v283 = vld [vmem:[#allocation2 + $0x29] sm:$0xff]
        %v284 = vld [vmem:[#allocation2 + $0x31] sm:$0xff]
        %v285 = vld [vmem:[#allocation2 + $0x39] sm:$0xff]
        %v286 = vld [vmem:[#allocation2 + $0x41] sm:$0xff]
        %v287 = vld [vmem:[#allocation2 + $0x49] sm:$0xff]
        %v288 = vld [vmem:[#allocation2 + $0x51] sm:$0xff]
        %v289 = vld [vmem:[#allocation2 + $0x59] sm:$0xff]
        %s290 = scalar_lea.vmem [#allocation6], 128
        %v291 = vld [vmem:[%s290] sm:$0xff]
        %v292 = vld [vmem:[%s290 + $0x8] sm:$0xff]
        %v293 = vld [vmem:[%s290 + $0x10] sm:$0xff]
        %v294 = vld [vmem:[%s290 + $0x18] sm:$0xff]
        %v295 = vld [vmem:[%s290 + $0x20] sm:$0xff]
        %v296 = vld [vmem:[%s290 + $0x28] sm:$0xff]
        %v297 = vld [vmem:[%s290 + $0x30] sm:$0xff]
        %v298 = vld [vmem:[%s290 + $0x38] sm:$0xff]
        %v299 = vld [vmem:[%s290 + $0x40] sm:$0xff]
        %v300 = vld [vmem:[%s290 + $0x48] sm:$0xff]
        %v301 = vld [vmem:[%s290 + $0x50] sm:$0xff]
        %v302 = vld [vmem:[%s290 + $0x58] sm:$0xff]
        %v303 = vld [vmem:[%s290 + $0x60] sm:$0xff]
        %v304 = vld [vmem:[%s290 + $0x68] sm:$0xff]
        %v305 = vld [vmem:[%s290 + $0x70] sm:$0xff]
        %v306 = vld [vmem:[%s290 + $0x78] sm:$0xff]
        %307 = vmatpush.msra.mxu0 %v306
        %308 = vmatpush.msra.mxu0 %v305
        %309 = vmatpush.msra.mxu0 %v304
        %310 = vmatpush.msra.mxu0 %v303
        %311 = vmatpush.msra.mxu0 %v302
        %312 = vmatpush.msra.mxu0 %v301
        %313 = vmatpush.msra.mxu0 %v300
        %314 = vmatpush.msra.mxu0 %v299
        %315 = vmatpush.msra.mxu0 %v298
        %316 = vmatpush.msra.mxu0 %v297
        %317 = vmatpush.msra.mxu0 %v296
        %318 = vmatpush.msra.mxu0 %v295
        %319 = vmatpush.msra.mxu0 %v294
        %320 = vmatpush.msra.mxu0 %v293
        %321 = vmatpush.msra.mxu0 %v292
        %322 = vmatpush.msra.mxu0 %v291
        %323 = vmatmul.f32.gmra.mxu0 %v278
        %v324 = vpop.f32.mrf.mxu0
        %v325 = vadd.f32 0.0, %v324
        %326 = vmatmul.f32.gmra.mxu0 %v279
        %v327 = vpop.f32.mrf.mxu0
        %v328 = vadd.f32 0.0, %v327
        %329 = vmatmul.f32.gmra.mxu0 %v280
        %v330 = vpop.f32.mrf.mxu0
        %v331 = vadd.f32 0.0, %v330
        %332 = vmatmul.f32.gmra.mxu0 %v281
        %v333 = vpop.f32.mrf.mxu0
        %v334 = vadd.f32 0.0, %v333
        %335 = vmatmul.f32.gmra.mxu0 %v282
        %v336 = vpop.f32.mrf.mxu0
        %v337 = vadd.f32 0.0, %v336
        %338 = vmatmul.f32.gmra.mxu0 %v283
        %v339 = vpop.f32.mrf.mxu0
        %v340 = vadd.f32 0.0, %v339
        %341 = vmatmul.f32.gmra.mxu0 %v284
        %v342 = vpop.f32.mrf.mxu0
        %v343 = vadd.f32 0.0, %v342
        %344 = vmatmul.f32.gmra.mxu0 %v285
        %v345 = vpop.f32.mrf.mxu0
        %v346 = vadd.f32 0.0, %v345
        %347 = vmatmul.f32.gmra.mxu0 %v286
        %v348 = vpop.f32.mrf.mxu0
        %v349 = vadd.f32 0.0, %v348
        %350 = vmatmul.f32.gmra.mxu0 %v287
        %v351 = vpop.f32.mrf.mxu0
        %v352 = vadd.f32 0.0, %v351
        %353 = vmatmul.f32.gmra.mxu0 %v288
        %v354 = vpop.f32.mrf.mxu0
        %v355 = vadd.f32 0.0, %v354
        %356 = vmatmul.f32.gmra.mxu0 %v289
        %v357 = vpop.f32.mrf.mxu0
        %v358 = vadd.f32 0.0, %v357
        %359 = vdwg.mxu0
        %360 = vmatpush.msra.mxu0 %v277
        %361 = vmatpush.msra.mxu0 %v276
        %362 = vmatpush.msra.mxu0 %v275
        %363 = vmatpush.msra.mxu0 %v274
        %364 = vmatpush.msra.mxu0 %v273
        %365 = vmatpush.msra.mxu0 %v272
        %366 = vmatpush.msra.mxu0 %v271
        %367 = vmatpush.msra.mxu0 %v270
        %368 = vmatpush.msra.mxu0 %v269
        %369 = vmatpush.msra.mxu0 %v268
        %370 = vmatpush.msra.mxu0 %v267
        %371 = vmatpush.msra.mxu0 %v266
        %372 = vmatpush.msra.mxu0 %v265
        %373 = vmatpush.msra.mxu0 %v264
        %374 = vmatpush.msra.mxu0 %v263
        %375 = vmatpush.msra.mxu0 %v262
        %376 = vmatmul.f32.gmra.mxu0 %v250
        %v377 = vpop.f32.mrf.mxu0
        %v378 = vadd.f32 %v325, %v377
        %379 = vmatmul.f32.gmra.mxu0 %v251
        %v380 = vpop.f32.mrf.mxu0
        %v381 = vadd.f32 %v328, %v380
        %382 = vmatmul.f32.gmra.mxu0 %v252
        %v383 = vpop.f32.mrf.mxu0
        %v384 = vadd.f32 %v331, %v383
        %385 = vmatmul.f32.gmra.mxu0 %v253
        %v386 = vpop.f32.mrf.mxu0
        %v387 = vadd.f32 %v334, %v386
        %388 = vmatmul.f32.gmra.mxu0 %v254
        %v389 = vpop.f32.mrf.mxu0
        %v390 = vadd.f32 %v337, %v389
        %391 = vmatmul.f32.gmra.mxu0 %v255
        %v392 = vpop.f32.mrf.mxu0
        %v393 = vadd.f32 %v340, %v392
        %394 = vmatmul.f32.gmra.mxu0 %v256
        %v395 = vpop.f32.mrf.mxu0
        %v396 = vadd.f32 %v343, %v395
        %397 = vmatmul.f32.gmra.mxu0 %v257
        %v398 = vpop.f32.mrf.mxu0
        %v399 = vadd.f32 %v346, %v398
        %400 = vmatmul.f32.gmra.mxu0 %v258
        %v401 = vpop.f32.mrf.mxu0
        %v402 = vadd.f32 %v349, %v401
        %403 = vmatmul.f32.gmra.mxu0 %v259
        %v404 = vpop.f32.mrf.mxu0
        %v405 = vadd.f32 %v352, %v404
        %406 = vmatmul.f32.gmra.mxu0 %v260
        %v407 = vpop.f32.mrf.mxu0
        %v408 = vadd.f32 %v355, %v407
        %409 = vmatmul.f32.gmra.mxu0 %v261
        %v410 = vpop.f32.mrf.mxu0
        %v411 = vadd.f32 %v358, %v410
        %412 = vdwg.mxu0
        %v413 = vld [vmem:[#allocation2 + $0x2] sm:$0xff]
        %v414 = vld [vmem:[#allocation2 + $0xa] sm:$0xff]
        %v415 = vld [vmem:[#allocation2 + $0x12] sm:$0xff]
        %v416 = vld [vmem:[#allocation2 + $0x1a] sm:$0xff]
        %v417 = vld [vmem:[#allocation2 + $0x22] sm:$0xff]
        %v418 = vld [vmem:[#allocation2 + $0x2a] sm:$0xff]
        %v419 = vld [vmem:[#allocation2 + $0x32] sm:$0xff]
        %v420 = vld [vmem:[#allocation2 + $0x3a] sm:$0xff]
        %v421 = vld [vmem:[#allocation2 + $0x42] sm:$0xff]
        %v422 = vld [vmem:[#allocation2 + $0x4a] sm:$0xff]
        %v423 = vld [vmem:[#allocation2 + $0x52] sm:$0xff]
        %v424 = vld [vmem:[#allocation2 + $0x5a] sm:$0xff]
        %s425 = scalar_lea.vmem [#allocation6], 256
        %v426 = vld [vmem:[%s425] sm:$0xff]
        %v427 = vld [vmem:[%s425 + $0x8] sm:$0xff]
        %v428 = vld [vmem:[%s425 + $0x10] sm:$0xff]
        %v429 = vld [vmem:[%s425 + $0x18] sm:$0xff]
        %v430 = vld [vmem:[%s425 + $0x20] sm:$0xff]
        %v431 = vld [vmem:[%s425 + $0x28] sm:$0xff]
        %v432 = vld [vmem:[%s425 + $0x30] sm:$0xff]
        %v433 = vld [vmem:[%s425 + $0x38] sm:$0xff]
        %v434 = vld [vmem:[%s425 + $0x40] sm:$0xff]
        %v435 = vld [vmem:[%s425 + $0x48] sm:$0xff]
        %v436 = vld [vmem:[%s425 + $0x50] sm:$0xff]
        %v437 = vld [vmem:[%s425 + $0x58] sm:$0xff]
        %v438 = vld [vmem:[%s425 + $0x60] sm:$0xff]
        %v439 = vld [vmem:[%s425 + $0x68] sm:$0xff]
        %v440 = vld [vmem:[%s425 + $0x70] sm:$0xff]
        %v441 = vld [vmem:[%s425 + $0x78] sm:$0xff]
        %442 = vmatpush.msra.mxu0 %v441
        %443 = vmatpush.msra.mxu0 %v440
        %444 = vmatpush.msra.mxu0 %v439
        %445 = vmatpush.msra.mxu0 %v438
        %446 = vmatpush.msra.mxu0 %v437
        %447 = vmatpush.msra.mxu0 %v436
        %448 = vmatpush.msra.mxu0 %v435
        %449 = vmatpush.msra.mxu0 %v434
        %450 = vmatpush.msra.mxu0 %v433
        %451 = vmatpush.msra.mxu0 %v432
        %452 = vmatpush.msra.mxu0 %v431
        %453 = vmatpush.msra.mxu0 %v430
        %454 = vmatpush.msra.mxu0 %v429
        %455 = vmatpush.msra.mxu0 %v428
        %456 = vmatpush.msra.mxu0 %v427
        %457 = vmatpush.msra.mxu0 %v426
        %458 = vmatmul.f32.gmra.mxu0 %v413
        %v459 = vpop.f32.mrf.mxu0
        %v460 = vadd.f32 0.0, %v459
        %461 = vmatmul.f32.gmra.mxu0 %v414
        %v462 = vpop.f32.mrf.mxu0
        %v463 = vadd.f32 0.0, %v462
        %464 = vmatmul.f32.gmra.mxu0 %v415
        %v465 = vpop.f32.mrf.mxu0
        %v466 = vadd.f32 0.0, %v465
        %467 = vmatmul.f32.gmra.mxu0 %v416
        %v468 = vpop.f32.mrf.mxu0
        %v469 = vadd.f32 0.0, %v468
        %470 = vmatmul.f32.gmra.mxu0 %v417
        %v471 = vpop.f32.mrf.mxu0
        %v472 = vadd.f32 0.0, %v471
        %473 = vmatmul.f32.gmra.mxu0 %v418
        %v474 = vpop.f32.mrf.mxu0
        %v475 = vadd.f32 0.0, %v474
        %476 = vmatmul.f32.gmra.mxu0 %v419
        %v477 = vpop.f32.mrf.mxu0
        %v478 = vadd.f32 0.0, %v477
        %479 = vmatmul.f32.gmra.mxu0 %v420
        %v480 = vpop.f32.mrf.mxu0
        %v481 = vadd.f32 0.0, %v480
        %482 = vmatmul.f32.gmra.mxu0 %v421
        %v483 = vpop.f32.mrf.mxu0
        %v484 = vadd.f32 0.0, %v483
        %485 = vmatmul.f32.gmra.mxu0 %v422
        %v486 = vpop.f32.mrf.mxu0
        %v487 = vadd.f32 0.0, %v486
        %488 = vmatmul.f32.gmra.mxu0 %v423
        %v489 = vpop.f32.mrf.mxu0
        %v490 = vadd.f32 0.0, %v489
        %491 = vmatmul.f32.gmra.mxu0 %v424
        %v492 = vpop.f32.mrf.mxu0
        %v493 = vadd.f32 0.0, %v492
        %494 = vdwg.mxu0
        %v495 = vadd.f32 %v378, %v460
        %v496 = vadd.f32 %v381, %v463
        %v497 = vadd.f32 %v384, %v466
        %v498 = vadd.f32 %v387, %v469
        %v499 = vadd.f32 %v390, %v472
        %v500 = vadd.f32 %v393, %v475
        %v501 = vadd.f32 %v396, %v478
        %v502 = vadd.f32 %v399, %v481
        %v503 = vadd.f32 %v402, %v484
        %v504 = vadd.f32 %v405, %v487
        %v505 = vadd.f32 %v408, %v490
        %v506 = vadd.f32 %v411, %v493
        %v507 = vld [vmem:[#allocation8] sm:$0x1]
        %v508 = vperm.slane %v507, 0
        %v509 = vadd.f32 %v495, %v508
        %v510 = vadd.f32 %v496, %v508
        %v511 = vadd.f32 %v497, %v508
        %v512 = vadd.f32 %v498, %v508
        %v513 = vadd.f32 %v499, %v508
        %v514 = vadd.f32 %v500, %v508
        %v515 = vadd.f32 %v501, %v508
        %v516 = vadd.f32 %v502, %v508
        %v517 = vadd.f32 %v503, %v508
        %v518 = vadd.f32 %v504, %v508
        %v519 = vadd.f32 %v505, %v508
        %v520 = vadd.f32 %v506, %v508
        %v521 = vmax.f32 %v509, 0.0
        %v522 = vmax.f32 %v510, 0.0
        %v523 = vmax.f32 %v511, 0.0
        %v524 = vmax.f32 %v512, 0.0
        %v525 = vmax.f32 %v513, 0.0
        %v526 = vmax.f32 %v514, 0.0
        %v527 = vmax.f32 %v515, 0.0
        %v528 = vmax.f32 %v516, 0.0
        %v529 = vmax.f32 %v517, 0.0
        %v530 = vmax.f32 %v518, 0.0
        %v531 = vmax.f32 %v519, 0.0
        %v532 = vmax.f32 %v520, 0.0
        %533 = vst [vmem:[#allocation2] sm:$0xff] %v521
        %534 = vst [vmem:[#allocation2 + $0x8] sm:$0xff] %v522
        %535 = vst [vmem:[#allocation2 + $0x10] sm:$0xff] %v523
        %536 = vst [vmem:[#allocation2 + $0x18] sm:$0xff] %v524
        %537 = vst [vmem:[#allocation2 + $0x20] sm:$0xff] %v525
        %538 = vst [vmem:[#allocation2 + $0x28] sm:$0xff] %v526
        %539 = vst [vmem:[#allocation2 + $0x30] sm:$0xff] %v527
        %540 = vst [vmem:[#allocation2 + $0x38] sm:$0xff] %v528
        %541 = vst [vmem:[#allocation2 + $0x40] sm:$0xff] %v529
        %542 = vst [vmem:[#allocation2 + $0x48] sm:$0xff] %v530
        %543 = vst [vmem:[#allocation2 + $0x50] sm:$0xff] %v531
        %544 = vst [vmem:[#allocation2 + $0x58] sm:$0xff] %v532
        %v545 = vld [vmem:[#allocation2] sm:$0xff]
        %v546 = vld [vmem:[#allocation2 + $0x8] sm:$0xff]
        %v547 = vld [vmem:[#allocation2 + $0x10] sm:$0xff]
        %v548 = vld [vmem:[#allocation2 + $0x18] sm:$0xff]
        %v549 = vld [vmem:[#allocation2 + $0x20] sm:$0xff]
        %v550 = vld [vmem:[#allocation2 + $0x28] sm:$0xff]
        %v551 = vld [vmem:[#allocation2 + $0x30] sm:$0xff]
        %v552 = vld [vmem:[#allocation2 + $0x38] sm:$0xff]
        %v553 = vld [vmem:[#allocation2 + $0x40] sm:$0xff]
        %v554 = vld [vmem:[#allocation2 + $0x48] sm:$0xff]
        %v555 = vld [vmem:[#allocation2 + $0x50] sm:$0xff]
        %v556 = vld [vmem:[#allocation2 + $0x58] sm:$0xff]
        %s557 = scalar_lea.vmem [#allocation6], 384
        %v558 = vld [vmem:[%s557] sm:$0xff]
        %v559 = vld [vmem:[%s557 + $0x8] sm:$0xff]
        %v560 = vld [vmem:[%s557 + $0x10] sm:$0xff]
        %v561 = vld [vmem:[%s557 + $0x18] sm:$0xff]
        %v562 = vld [vmem:[%s557 + $0x20] sm:$0xff]
        %v563 = vld [vmem:[%s557 + $0x28] sm:$0xff]
        %v564 = vld [vmem:[%s557 + $0x30] sm:$0xff]
        %v565 = vld [vmem:[%s557 + $0x38] sm:$0xff]
        %v566 = vld [vmem:[%s557 + $0x40] sm:$0xff]
        %v567 = vld [vmem:[%s557 + $0x48] sm:$0xff]
        %v568 = vld [vmem:[%s557 + $0x50] sm:$0xff]
        %v569 = vld [vmem:[%s557 + $0x58] sm:$0xff]
        %v570 = vld [vmem:[%s557 + $0x60] sm:$0xff]
        %v571 = vld [vmem:[%s557 + $0x68] sm:$0xff]
        %v572 = vld [vmem:[%s557 + $0x70] sm:$0xff]
        %v573 = vld [vmem:[%s557 + $0x78] sm:$0xff]
        %v574 = vld [vmem:[#allocation2 + $0x1] sm:$0xff]
        %v575 = vld [vmem:[#allocation2 + $0x9] sm:$0xff]
        %v576 = vld [vmem:[#allocation2 + $0x11] sm:$0xff]
        %v577 = vld [vmem:[#allocation2 + $0x19] sm:$0xff]
        %v578 = vld [vmem:[#allocation2 + $0x21] sm:$0xff]
        %v579 = vld [vmem:[#allocation2 + $0x29] sm:$0xff]
        %v580 = vld [vmem:[#allocation2 + $0x31] sm:$0xff]
        %v581 = vld [vmem:[#allocation2 + $0x39] sm:$0xff]
        %v582 = vld [vmem:[#allocation2 + $0x41] sm:$0xff]
        %v583 = vld [vmem:[#allocation2 + $0x49] sm:$0xff]
        %v584 = vld [vmem:[#allocation2 + $0x51] sm:$0xff]
        %v585 = vld [vmem:[#allocation2 + $0x59] sm:$0xff]
        %s586 = scalar_lea.vmem [#allocation6], 512
        %v587 = vld [vmem:[%s586] sm:$0xff]
        %v588 = vld [vmem:[%s586 + $0x8] sm:$0xff]
        %v589 = vld [vmem:[%s586 + $0x10] sm:$0xff]
        %v590 = vld [vmem:[%s586 + $0x18] sm:$0xff]
        %v591 = vld [vmem:[%s586 + $0x20] sm:$0xff]
        %v592 = vld [vmem:[%s586 + $0x28] sm:$0xff]
        %v593 = vld [vmem:[%s586 + $0x30] sm:$0xff]
        %v594 = vld [vmem:[%s586 + $0x38] sm:$0xff]
        %v595 = vld [vmem:[%s586 + $0x40] sm:$0xff]
        %v596 = vld [vmem:[%s586 + $0x48] sm:$0xff]
        %v597 = vld [vmem:[%s586 + $0x50] sm:$0xff]
        %v598 = vld [vmem:[%s586 + $0x58] sm:$0xff]
        %v599 = vld [vmem:[%s586 + $0x60] sm:$0xff]
        %v600 = vld [vmem:[%s586 + $0x68] sm:$0xff]
        %v601 = vld [vmem:[%s586 + $0x70] sm:$0xff]
        %v602 = vld [vmem:[%s586 + $0x78] sm:$0xff]
        %603 = vmatpush.msra.mxu0 %v602
        %604 = vmatpush.msra.mxu0 %v601
        %605 = vmatpush.msra.mxu0 %v600
        %606 = vmatpush.msra.mxu0 %v599
        %607 = vmatpush.msra.mxu0 %v598
        %608 = vmatpush.msra.mxu0 %v597
        %609 = vmatpush.msra.mxu0 %v596
        %610 = vmatpush.msra.mxu0 %v595
        %611 = vmatpush.msra.mxu0 %v594
        %612 = vmatpush.msra.mxu0 %v593
        %613 = vmatpush.msra.mxu0 %v592
        %614 = vmatpush.msra.mxu0 %v591
        %615 = vmatpush.msra.mxu0 %v590
        %616 = vmatpush.msra.mxu0 %v589
        %617 = vmatpush.msra.mxu0 %v588
        %618 = vmatpush.msra.mxu0 %v587
        %619 = vmatmul.f32.gmra.mxu0 %v574
        %v620 = vpop.f32.mrf.mxu0
        %v621 = vadd.f32 0.0, %v620
        %622 = vmatmul.f32.gmra.mxu0 %v575
        %v623 = vpop.f32.mrf.mxu0
        %v624 = vadd.f32 0.0, %v623
        %625 = vmatmul.f32.gmra.mxu0 %v576
        %v626 = vpop.f32.mrf.mxu0
        %v627 = vadd.f32 0.0, %v626
        %628 = vmatmul.f32.gmra.mxu0 %v577
        %v629 = vpop.f32.mrf.mxu0
        %v630 = vadd.f32 0.0, %v629
        %631 = vmatmul.f32.gmra.mxu0 %v578
        %v632 = vpop.f32.mrf.mxu0
        %v633 = vadd.f32 0.0, %v632
        %634 = vmatmul.f32.gmra.mxu0 %v579
        %v635 = vpop.f32.mrf.mxu0
        %v636 = vadd.f32 0.0, %v635
        %637 = vmatmul.f32.gmra.mxu0 %v580
        %v638 = vpop.f32.mrf.mxu0
        %v639 = vadd.f32 0.0, %v638
        %640 = vmatmul.f32.gmra.mxu0 %v581
        %v641 = vpop.f32.mrf.mxu0
        %v642 = vadd.f32 0.0, %v641
        %643 = vmatmul.f32.gmra.mxu0 %v582
        %v644 = vpop.f32.mrf.mxu0
        %v645 = vadd.f32 0.0, %v644
        %646 = vmatmul.f32.gmra.mxu0 %v583
        %v647 = vpop.f32.mrf.mxu0
        %v648 = vadd.f32 0.0, %v647
        %649 = vmatmul.f32.gmra.mxu0 %v584
        %v650 = vpop.f32.mrf.mxu0
        %v651 = vadd.f32 0.0, %v650
        %652 = vmatmul.f32.gmra.mxu0 %v585
        %v653 = vpop.f32.mrf.mxu0
        %v654 = vadd.f32 0.0, %v653
        %655 = vdwg.mxu0
        %656 = vmatpush.msra.mxu0 %v573
        %657 = vmatpush.msra.mxu0 %v572
        %658 = vmatpush.msra.mxu0 %v571
        %659 = vmatpush.msra.mxu0 %v570
        %660 = vmatpush.msra.mxu0 %v569
        %661 = vmatpush.msra.mxu0 %v568
        %662 = vmatpush.msra.mxu0 %v567
        %663 = vmatpush.msra.mxu0 %v566
        %664 = vmatpush.msra.mxu0 %v565
        %665 = vmatpush.msra.mxu0 %v564
        %666 = vmatpush.msra.mxu0 %v563
        %667 = vmatpush.msra.mxu0 %v562
        %668 = vmatpush.msra.mxu0 %v561
        %669 = vmatpush.msra.mxu0 %v560
        %670 = vmatpush.msra.mxu0 %v559
        %671 = vmatpush.msra.mxu0 %v558
        %672 = vmatmul.f32.gmra.mxu0 %v545
        %v673 = vpop.f32.mrf.mxu0
        %v674 = vadd.f32 %v621, %v673
        %675 = vmatmul.f32.gmra.mxu0 %v546
        %v676 = vpop.f32.mrf.mxu0
        %v677 = vadd.f32 %v624, %v676
        %678 = vmatmul.f32.gmra.mxu0 %v547
        %v679 = vpop.f32.mrf.mxu0
        %v680 = vadd.f32 %v627, %v679
        %681 = vmatmul.f32.gmra.mxu0 %v548
        %v682 = vpop.f32.mrf.mxu0
        %v683 = vadd.f32 %v630, %v682
        %684 = vmatmul.f32.gmra.mxu0 %v549
        %v685 = vpop.f32.mrf.mxu0
        %v686 = vadd.f32 %v633, %v685
        %687 = vmatmul.f32.gmra.mxu0 %v550
        %v688 = vpop.f32.mrf.mxu0
        %v689 = vadd.f32 %v636, %v688
        %690 = vmatmul.f32.gmra.mxu0 %v551
        %v691 = vpop.f32.mrf.mxu0
        %v692 = vadd.f32 %v639, %v691
        %693 = vmatmul.f32.gmra.mxu0 %v552
        %v694 = vpop.f32.mrf.mxu0
        %v695 = vadd.f32 %v642, %v694
        %696 = vmatmul.f32.gmra.mxu0 %v553
        %v697 = vpop.f32.mrf.mxu0
        %v698 = vadd.f32 %v645, %v697
        %699 = vmatmul.f32.gmra.mxu0 %v554
        %v700 = vpop.f32.mrf.mxu0
        %v701 = vadd.f32 %v648, %v700
        %702 = vmatmul.f32.gmra.mxu0 %v555
        %v703 = vpop.f32.mrf.mxu0
        %v704 = vadd.f32 %v651, %v703
        %705 = vmatmul.f32.gmra.mxu0 %v556
        %v706 = vpop.f32.mrf.mxu0
        %v707 = vadd.f32 %v654, %v706
        %708 = vdwg.mxu0
        %v709 = vld [vmem:[#allocation2 + $0x2] sm:$0xff]
        %v710 = vld [vmem:[#allocation2 + $0xa] sm:$0xff]
        %v711 = vld [vmem:[#allocation2 + $0x12] sm:$0xff]
        %v712 = vld [vmem:[#allocation2 + $0x1a] sm:$0xff]
        %v713 = vld [vmem:[#allocation2 + $0x22] sm:$0xff]
        %v714 = vld [vmem:[#allocation2 + $0x2a] sm:$0xff]
        %v715 = vld [vmem:[#allocation2 + $0x32] sm:$0xff]
        %v716 = vld [vmem:[#allocation2 + $0x3a] sm:$0xff]
        %v717 = vld [vmem:[#allocation2 + $0x42] sm:$0xff]
        %v718 = vld [vmem:[#allocation2 + $0x4a] sm:$0xff]
        %v719 = vld [vmem:[#allocation2 + $0x52] sm:$0xff]
        %v720 = vld [vmem:[#allocation2 + $0x5a] sm:$0xff]
        %s721 = scalar_lea.vmem [#allocation6], 640
        %v722 = vld [vmem:[%s721] sm:$0xff]
        %v723 = vld [vmem:[%s721 + $0x8] sm:$0xff]
        %v724 = vld [vmem:[%s721 + $0x10] sm:$0xff]
        %v725 = vld [vmem:[%s721 + $0x18] sm:$0xff]
        %v726 = vld [vmem:[%s721 + $0x20] sm:$0xff]
        %v727 = vld [vmem:[%s721 + $0x28] sm:$0xff]
        %v728 = vld [vmem:[%s721 + $0x30] sm:$0xff]
        %v729 = vld [vmem:[%s721 + $0x38] sm:$0xff]
        %v730 = vld [vmem:[%s721 + $0x40] sm:$0xff]
        %v731 = vld [vmem:[%s721 + $0x48] sm:$0xff]
        %v732 = vld [vmem:[%s721 + $0x50] sm:$0xff]
        %v733 = vld [vmem:[%s721 + $0x58] sm:$0xff]
        %v734 = vld [vmem:[%s721 + $0x60] sm:$0xff]
        %v735 = vld [vmem:[%s721 + $0x68] sm:$0xff]
        %v736 = vld [vmem:[%s721 + $0x70] sm:$0xff]
        %v737 = vld [vmem:[%s721 + $0x78] sm:$0xff]
        %738 = vmatpush.msra.mxu0 %v737
        %739 = vmatpush.msra.mxu0 %v736
        %740 = vmatpush.msra.mxu0 %v735
        %741 = vmatpush.msra.mxu0 %v734
        %742 = vmatpush.msra.mxu0 %v733
        %743 = vmatpush.msra.mxu0 %v732
        %744 = vmatpush.msra.mxu0 %v731
        %745 = vmatpush.msra.mxu0 %v730
        %746 = vmatpush.msra.mxu0 %v729
        %747 = vmatpush.msra.mxu0 %v728
        %748 = vmatpush.msra.mxu0 %v727
        %749 = vmatpush.msra.mxu0 %v726
        %750 = vmatpush.msra.mxu0 %v725
        %751 = vmatpush.msra.mxu0 %v724
        %752 = vmatpush.msra.mxu0 %v723
        %753 = vmatpush.msra.mxu0 %v722
        %754 = vmatmul.f32.gmra.mxu0 %v709
        %v755 = vpop.f32.mrf.mxu0
        %v756 = vadd.f32 0.0, %v755
        %757 = vmatmul.f32.gmra.mxu0 %v710
        %v758 = vpop.f32.mrf.mxu0
        %v759 = vadd.f32 0.0, %v758
        %760 = vmatmul.f32.gmra.mxu0 %v711
        %v761 = vpop.f32.mrf.mxu0
        %v762 = vadd.f32 0.0, %v761
        %763 = vmatmul.f32.gmra.mxu0 %v712
        %v764 = vpop.f32.mrf.mxu0
        %v765 = vadd.f32 0.0, %v764
        %766 = vmatmul.f32.gmra.mxu0 %v713
        %v767 = vpop.f32.mrf.mxu0
        %v768 = vadd.f32 0.0, %v767
        %769 = vmatmul.f32.gmra.mxu0 %v714
        %v770 = vpop.f32.mrf.mxu0
        %v771 = vadd.f32 0.0, %v770
        %772 = vmatmul.f32.gmra.mxu0 %v715
        %v773 = vpop.f32.mrf.mxu0
        %v774 = vadd.f32 0.0, %v773
        %775 = vmatmul.f32.gmra.mxu0 %v716
        %v776 = vpop.f32.mrf.mxu0
        %v777 = vadd.f32 0.0, %v776
        %778 = vmatmul.f32.gmra.mxu0 %v717
        %v779 = vpop.f32.mrf.mxu0
        %v780 = vadd.f32 0.0, %v779
        %781 = vmatmul.f32.gmra.mxu0 %v718
        %v782 = vpop.f32.mrf.mxu0
        %v783 = vadd.f32 0.0, %v782
        %784 = vmatmul.f32.gmra.mxu0 %v719
        %v785 = vpop.f32.mrf.mxu0
        %v786 = vadd.f32 0.0, %v785
        %787 = vmatmul.f32.gmra.mxu0 %v720
        %v788 = vpop.f32.mrf.mxu0
        %v789 = vadd.f32 0.0, %v788
        %790 = vdwg.mxu0
        %v791 = vadd.f32 %v674, %v756
        %v792 = vadd.f32 %v677, %v759
        %v793 = vadd.f32 %v680, %v762
        %v794 = vadd.f32 %v683, %v765
        %v795 = vadd.f32 %v686, %v768
        %v796 = vadd.f32 %v689, %v771
        %v797 = vadd.f32 %v692, %v774
        %v798 = vadd.f32 %v695, %v777
        %v799 = vadd.f32 %v698, %v780
        %v800 = vadd.f32 %v701, %v783
        %v801 = vadd.f32 %v704, %v786
        %v802 = vadd.f32 %v707, %v789
        %v803 = vld [vmem:[#allocation8 + $0x1] sm:$0x1]
        %v804 = vperm.slane %v803, 0
        %v805 = vadd.f32 %v791, %v804
        %v806 = vadd.f32 %v792, %v804
        %v807 = vadd.f32 %v793, %v804
        %v808 = vadd.f32 %v794, %v804
        %v809 = vadd.f32 %v795, %v804
        %v810 = vadd.f32 %v796, %v804
        %v811 = vadd.f32 %v797, %v804
        %v812 = vadd.f32 %v798, %v804
        %v813 = vadd.f32 %v799, %v804
        %v814 = vadd.f32 %v800, %v804
        %v815 = vadd.f32 %v801, %v804
        %v816 = vadd.f32 %v802, %v804
        %v817 = vmax.f32 %v805, 0.0
        %v818 = vmax.f32 %v806, 0.0
        %v819 = vmax.f32 %v807, 0.0
        %v820 = vmax.f32 %v808, 0.0
        %v821 = vmax.f32 %v809, 0.0
        %v822 = vmax.f32 %v810, 0.0
        %v823 = vmax.f32 %v811, 0.0
        %v824 = vmax.f32 %v812, 0.0
        %v825 = vmax.f32 %v813, 0.0
        %v826 = vmax.f32 %v814, 0.0
        %v827 = vmax.f32 %v815, 0.0
        %v828 = vmax.f32 %v816, 0.0
        %v829 = vadd.f32 %v817, %v226
        %v830 = vadd.f32 %v818, %v227
        %v831 = vadd.f32 %v819, %v228
        %v832 = vadd.f32 %v820, %v229
        %v833 = vadd.f32 %v821, %v230
        %v834 = vadd.f32 %v822, %v231
        %v835 = vadd.f32 %v823, %v232
        %v836 = vadd.f32 %v824, %v233
        %v837 = vadd.f32 %v825, %v234
        %v838 = vadd.f32 %v826, %v235
        %v839 = vadd.f32 %v827, %v236
        %v840 = vadd.f32 %v828, %v237
        %841 = vst [vmem:[#allocation2] sm:$0xff] %v829
        %842 = vst [vmem:[#allocation2 + $0x8] sm:$0xff] %v830
        %843 = vst [vmem:[#allocation2 + $0x10] sm:$0xff] %v831
        %844 = vst [vmem:[#allocation2 + $0x18] sm:$0xff] %v832
        %845 = vst [vmem:[#allocation2 + $0x20] sm:$0xff] %v833
        %846 = vst [vmem:[#allocation2 + $0x28] sm:$0xff] %v834
        %847 = vst [vmem:[#allocation2 + $0x30] sm:$0xff] %v835
        %848 = vst [vmem:[#allocation2 + $0x38] sm:$0xff] %v836
        %849 = vst [vmem:[#allocation2 + $0x40] sm:$0xff] %v837
        %850 = vst [vmem:[#allocation2 + $0x48] sm:$0xff] %v838
        %851 = vst [vmem:[#allocation2 + $0x50] sm:$0xff] %v839
        %852 = vst [vmem:[#allocation2 + $0x58] sm:$0xff] %v840
        %v853 = vld [vmem:[#allocation2] sm:$0xff]
        %v854 = vld [vmem:[#allocation2 + $0x8] sm:$0xff]
        %v855 = vld [vmem:[#allocation2 + $0x10] sm:$0xff]
        %v856 = vld [vmem:[#allocation2 + $0x18] sm:$0xff]
        %v857 = vld [vmem:[#allocation2 + $0x20] sm:$0xff]
        %v858 = vld [vmem:[#allocation2 + $0x28] sm:$0xff]
        %v859 = vld [vmem:[#allocation2 + $0x30] sm:$0xff]
        %v860 = vld [vmem:[#allocation2 + $0x38] sm:$0xff]
        %v861 = vld [vmem:[#allocation2 + $0x40] sm:$0xff]
        %v862 = vld [vmem:[#allocation2 + $0x48] sm:$0xff]
        %v863 = vld [vmem:[#allocation2 + $0x50] sm:$0xff]
        %v864 = vld [vmem:[#allocation2 + $0x58] sm:$0xff]
        %s865 = scalar_lea.vmem [#allocation6], 768
        %v866 = vld [vmem:[%s865] sm:$0xff]
        %v867 = vld [vmem:[%s865 + $0x8] sm:$0xff]
        %v868 = vld [vmem:[%s865 + $0x10] sm:$0xff]
        %v869 = vld [vmem:[%s865 + $0x18] sm:$0xff]
        %v870 = vld [vmem:[%s865 + $0x20] sm:$0xff]
        %v871 = vld [vmem:[%s865 + $0x28] sm:$0xff]
        %v872 = vld [vmem:[%s865 + $0x30] sm:$0xff]
        %v873 = vld [vmem:[%s865 + $0x38] sm:$0xff]
        %v874 = vld [vmem:[%s865 + $0x40] sm:$0xff]
        %v875 = vld [vmem:[%s865 + $0x48] sm:$0xff]
        %v876 = vld [vmem:[%s865 + $0x50] sm:$0xff]
        %v877 = vld [vmem:[%s865 + $0x58] sm:$0xff]
        %v878 = vld [vmem:[%s865 + $0x60] sm:$0xff]
        %v879 = vld [vmem:[%s865 + $0x68] sm:$0xff]
        %v880 = vld [vmem:[%s865 + $0x70] sm:$0xff]
        %v881 = vld [vmem:[%s865 + $0x78] sm:$0xff]
        %v882 = vld [vmem:[#allocation2 + $0x1] sm:$0xff]
        %v883 = vld [vmem:[#allocation2 + $0x9] sm:$0xff]
        %v884 = vld [vmem:[#allocation2 + $0x11] sm:$0xff]
        %v885 = vld [vmem:[#allocation2 + $0x19] sm:$0xff]
        %v886 = vld [vmem:[#allocation2 + $0x21] sm:$0xff]
        %v887 = vld [vmem:[#allocation2 + $0x29] sm:$0xff]
        %v888 = vld [vmem:[#allocation2 + $0x31] sm:$0xff]
        %v889 = vld [vmem:[#allocation2 + $0x39] sm:$0xff]
        %v890 = vld [vmem:[#allocation2 + $0x41] sm:$0xff]
        %v891 = vld [vmem:[#allocation2 + $0x49] sm:$0xff]
        %v892 = vld [vmem:[#allocation2 + $0x51] sm:$0xff]
        %v893 = vld [vmem:[#allocation2 + $0x59] sm:$0xff]
        %s894 = scalar_lea.vmem [#allocation6], 896
        %v895 = vld [vmem:[%s894] sm:$0xff]
        %v896 = vld [vmem:[%s894 + $0x8] sm:$0xff]
        %v897 = vld [vmem:[%s894 + $0x10] sm:$0xff]
        %v898 = vld [vmem:[%s894 + $0x18] sm:$0xff]
        %v899 = vld [vmem:[%s894 + $0x20] sm:$0xff]
        %v900 = vld [vmem:[%s894 + $0x28] sm:$0xff]
        %v901 = vld [vmem:[%s894 + $0x30] sm:$0xff]
        %v902 = vld [vmem:[%s894 + $0x38] sm:$0xff]
        %v903 = vld [vmem:[%s894 + $0x40] sm:$0xff]
        %v904 = vld [vmem:[%s894 + $0x48] sm:$0xff]
        %v905 = vld [vmem:[%s894 + $0x50] sm:$0xff]
        %v906 = vld [vmem:[%s894 + $0x58] sm:$0xff]
        %v907 = vld [vmem:[%s894 + $0x60] sm:$0xff]
        %v908 = vld [vmem:[%s894 + $0x68] sm:$0xff]
        %v909 = vld [vmem:[%s894 + $0x70] sm:$0xff]
        %v910 = vld [vmem:[%s894 + $0x78] sm:$0xff]
        %911 = vmatpush.msra.mxu0 %v910
        %912 = vmatpush.msra.mxu0 %v909
        %913 = vmatpush.msra.mxu0 %v908
        %914 = vmatpush.msra.mxu0 %v907
        %915 = vmatpush.msra.mxu0 %v906
        %916 = vmatpush.msra.mxu0 %v905
        %917 = vmatpush.msra.mxu0 %v904
        %918 = vmatpush.msra.mxu0 %v903
        %919 = vmatpush.msra.mxu0 %v902
        %920 = vmatpush.msra.mxu0 %v901
        %921 = vmatpush.msra.mxu0 %v900
        %922 = vmatpush.msra.mxu0 %v899
        %923 = vmatpush.msra.mxu0 %v898
        %924 = vmatpush.msra.mxu0 %v897
        %925 = vmatpush.msra.mxu0 %v896
        %926 = vmatpush.msra.mxu0 %v895
        %927 = vmatmul.f32.gmra.mxu0 %v882
        %v928 = vpop.f32.mrf.mxu0
        %v929 = vadd.f32 0.0, %v928
        %930 = vmatmul.f32.gmra.mxu0 %v883
        %v931 = vpop.f32.mrf.mxu0
        %v932 = vadd.f32 0.0, %v931
        %933 = vmatmul.f32.gmra.mxu0 %v884
        %v934 = vpop.f32.mrf.mxu0
        %v935 = vadd.f32 0.0, %v934
        %936 = vmatmul.f32.gmra.mxu0 %v885
        %v937 = vpop.f32.mrf.mxu0
        %v938 = vadd.f32 0.0, %v937
        %939 = vmatmul.f32.gmra.mxu0 %v886
        %v940 = vpop.f32.mrf.mxu0
        %v941 = vadd.f32 0.0, %v940
        %942 = vmatmul.f32.gmra.mxu0 %v887
        %v943 = vpop.f32.mrf.mxu0
        %v944 = vadd.f32 0.0, %v943
        %945 = vmatmul.f32.gmra.mxu0 %v888
        %v946 = vpop.f32.mrf.mxu0
        %v947 = vadd.f32 0.0, %v946
        %948 = vmatmul.f32.gmra.mxu0 %v889
        %v949 = vpop.f32.mrf.mxu0
        %v950 = vadd.f32 0.0, %v949
        %951 = vmatmul.f32.gmra.mxu0 %v890
        %v952 = vpop.f32.mrf.mxu0
        %v953 = vadd.f32 0.0, %v952
        %954 = vmatmul.f32.gmra.mxu0 %v891
        %v955 = vpop.f32.mrf.mxu0
        %v956 = vadd.f32 0.0, %v955
        %957 = vmatmul.f32.gmra.mxu0 %v892
        %v958 = vpop.f32.mrf.mxu0
        %v959 = vadd.f32 0.0, %v958
        %960 = vmatmul.f32.gmra.mxu0 %v893
        %v961 = vpop.f32.mrf.mxu0
        %v962 = vadd.f32 0.0, %v961
        %963 = vdwg.mxu0
        %964 = vmatpush.msra.mxu0 %v881
        %965 = vmatpush.msra.mxu0 %v880
        %966 = vmatpush.msra.mxu0 %v879
        %967 = vmatpush.msra.mxu0 %v878
        %968 = vmatpush.msra.mxu0 %v877
        %969 = vmatpush.msra.mxu0 %v876
        %970 = vmatpush.msra.mxu0 %v875
        %971 = vmatpush.msra.mxu0 %v874
        %972 = vmatpush.msra.mxu0 %v873
        %973 = vmatpush.msra.mxu0 %v872
        %974 = vmatpush.msra.mxu0 %v871
        %975 = vmatpush.msra.mxu0 %v870
        %976 = vmatpush.msra.mxu0 %v869
        %977 = vmatpush.msra.mxu0 %v868
        %978 = vmatpush.msra.mxu0 %v867
        %979 = vmatpush.msra.mxu0 %v866
        %980 = vmatmul.f32.gmra.mxu0 %v853
        %v981 = vpop.f32.mrf.mxu0
        %v982 = vadd.f32 %v929, %v981
        %983 = vmatmul.f32.gmra.mxu0 %v854
        %v984 = vpop.f32.mrf.mxu0
        %v985 = vadd.f32 %v932, %v984
        %986 = vmatmul.f32.gmra.mxu0 %v855
        %v987 = vpop.f32.mrf.mxu0
        %v988 = vadd.f32 %v935, %v987
        %989 = vmatmul.f32.gmra.mxu0 %v856
        %v990 = vpop.f32.mrf.mxu0
        %v991 = vadd.f32 %v938, %v990
        %992 = vmatmul.f32.gmra.mxu0 %v857
        %v993 = vpop.f32.mrf.mxu0
        %v994 = vadd.f32 %v941, %v993
        %995 = vmatmul.f32.gmra.mxu0 %v858
        %v996 = vpop.f32.mrf.mxu0
        %v997 = vadd.f32 %v944, %v996
        %998 = vmatmul.f32.gmra.mxu0 %v859
        %v999 = vpop.f32.mrf.mxu0
        %v1000 = vadd.f32 %v947, %v999
        %1001 = vmatmul.f32.gmra.mxu0 %v860
        %v1002 = vpop.f32.mrf.mxu0
        %v1003 = vadd.f32 %v950, %v1002
        %1004 = vmatmul.f32.gmra.mxu0 %v861
        %v1005 = vpop.f32.mrf.mxu0
        %v1006 = vadd.f32 %v953, %v1005
        %1007 = vmatmul.f32.gmra.mxu0 %v862
        %v1008 = vpop.f32.mrf.mxu0
        %v1009 = vadd.f32 %v956, %v1008
        %1010 = vmatmul.f32.gmra.mxu0 %v863
        %v1011 = vpop.f32.mrf.mxu0
        %v1012 = vadd.f32 %v959, %v1011
        %1013 = vmatmul.f32.gmra.mxu0 %v864
        %v1014 = vpop.f32.mrf.mxu0
        %v1015 = vadd.f32 %v962, %v1014
        %1016 = vdwg.mxu0
        %v1017 = vld [vmem:[#allocation2 + $0x2] sm:$0xff]
        %v1018 = vld [vmem:[#allocation2 + $0xa] sm:$0xff]
        %v1019 = vld [vmem:[#allocation2 + $0x12] sm:$0xff]
        %v1020 = vld [vmem:[#allocation2 + $0x1a] sm:$0xff]
        %v1021 = vld [vmem:[#allocation2 + $0x22] sm:$0xff]
        %v1022 = vld [vmem:[#allocation2 + $0x2a] sm:$0xff]
        %v1023 = vld [vmem:[#allocation2 + $0x32] sm:$0xff]
        %v1024 = vld [vmem:[#allocation2 + $0x3a] sm:$0xff]
        %v1025 = vld [vmem:[#allocation2 + $0x42] sm:$0xff]
        %v1026 = vld [vmem:[#allocation2 + $0x4a] sm:$0xff]
        %v1027 = vld [vmem:[#allocation2 + $0x52] sm:$0xff]
        %v1028 = vld [vmem:[#allocation2 + $0x5a] sm:$0xff]
        %s1029 = scalar_lea.vmem [#allocation6], 1024
        %v1030 = vld [vmem:[%s1029] sm:$0xff]
        %v1031 = vld [vmem:[%s1029 + $0x8] sm:$0xff]
        %v1032 = vld [vmem:[%s1029 + $0x10] sm:$0xff]
        %v1033 = vld [vmem:[%s1029 + $0x18] sm:$0xff]
        %v1034 = vld [vmem:[%s1029 + $0x20] sm:$0xff]
        %v1035 = vld [vmem:[%s1029 + $0x28] sm:$0xff]
        %v1036 = vld [vmem:[%s1029 + $0x30] sm:$0xff]
        %v1037 = vld [vmem:[%s1029 + $0x38] sm:$0xff]
        %v1038 = vld [vmem:[%s1029 + $0x40] sm:$0xff]
        %v1039 = vld [vmem:[%s1029 + $0x48] sm:$0xff]
        %v1040 = vld [vmem:[%s1029 + $0x50] sm:$0xff]
        %v1041 = vld [vmem:[%s1029 + $0x58] sm:$0xff]
        %v1042 = vld [vmem:[%s1029 + $0x60] sm:$0xff]
        %v1043 = vld [vmem:[%s1029 + $0x68] sm:$0xff]
        %v1044 = vld [vmem:[%s1029 + $0x70] sm:$0xff]
        %v1045 = vld [vmem:[%s1029 + $0x78] sm:$0xff]
        %1046 = vmatpush.msra.mxu0 %v1045
        %1047 = vmatpush.msra.mxu0 %v1044
        %1048 = vmatpush.msra.mxu0 %v1043
        %1049 = vmatpush.msra.mxu0 %v1042
        %1050 = vmatpush.msra.mxu0 %v1041
        %1051 = vmatpush.msra.mxu0 %v1040
        %1052 = vmatpush.msra.mxu0 %v1039
        %1053 = vmatpush.msra.mxu0 %v1038
        %1054 = vmatpush.msra.mxu0 %v1037
        %1055 = vmatpush.msra.mxu0 %v1036
        %1056 = vmatpush.msra.mxu0 %v1035
        %1057 = vmatpush.msra.mxu0 %v1034
        %1058 = vmatpush.msra.mxu0 %v1033
        %1059 = vmatpush.msra.mxu0 %v1032
        %1060 = vmatpush.msra.mxu0 %v1031
        %1061 = vmatpush.msra.mxu0 %v1030
        %1062 = vmatmul.f32.gmra.mxu0 %v1017
        %v1063 = vpop.f32.mrf.mxu0
        %v1064 = vadd.f32 0.0, %v1063
        %1065 = vmatmul.f32.gmra.mxu0 %v1018
        %v1066 = vpop.f32.mrf.mxu0
        %v1067 = vadd.f32 0.0, %v1066
        %1068 = vmatmul.f32.gmra.mxu0 %v1019
        %v1069 = vpop.f32.mrf.mxu0
        %v1070 = vadd.f32 0.0, %v1069
        %1071 = vmatmul.f32.gmra.mxu0 %v1020
        %v1072 = vpop.f32.mrf.mxu0
        %v1073 = vadd.f32 0.0, %v1072
        %1074 = vmatmul.f32.gmra.mxu0 %v1021
        %v1075 = vpop.f32.mrf.mxu0
        %v1076 = vadd.f32 0.0, %v1075
        %1077 = vmatmul.f32.gmra.mxu0 %v1022
        %v1078 = vpop.f32.mrf.mxu0
        %v1079 = vadd.f32 0.0, %v1078
        %1080 = vmatmul.f32.gmra.mxu0 %v1023
        %v1081 = vpop.f32.mrf.mxu0
        %v1082 = vadd.f32 0.0, %v1081
        %1083 = vmatmul.f32.gmra.mxu0 %v1024
        %v1084 = vpop.f32.mrf.mxu0
        %v1085 = vadd.f32 0.0, %v1084
        %1086 = vmatmul.f32.gmra.mxu0 %v1025
        %v1087 = vpop.f32.mrf.mxu0
        %v1088 = vadd.f32 0.0, %v1087
        %1089 = vmatmul.f32.gmra.mxu0 %v1026
        %v1090 = vpop.f32.mrf.mxu0
        %v1091 = vadd.f32 0.0, %v1090
        %1092 = vmatmul.f32.gmra.mxu0 %v1027
        %v1093 = vpop.f32.mrf.mxu0
        %v1094 = vadd.f32 0.0, %v1093
        %1095 = vmatmul.f32.gmra.mxu0 %v1028
        %v1096 = vpop.f32.mrf.mxu0
        %v1097 = vadd.f32 0.0, %v1096
        %1098 = vdwg.mxu0
        %v1099 = vadd.f32 %v982, %v1064
        %v1100 = vadd.f32 %v985, %v1067
        %v1101 = vadd.f32 %v988, %v1070
        %v1102 = vadd.f32 %v991, %v1073
        %v1103 = vadd.f32 %v994, %v1076
        %v1104 = vadd.f32 %v997, %v1079
        %v1105 = vadd.f32 %v1000, %v1082
        %v1106 = vadd.f32 %v1003, %v1085
        %v1107 = vadd.f32 %v1006, %v1088
        %v1108 = vadd.f32 %v1009, %v1091
        %v1109 = vadd.f32 %v1012, %v1094
        %v1110 = vadd.f32 %v1015, %v1097
        %v1111 = vld [vmem:[#allocation8 + $0x2] sm:$0x1]
        %v1112 = vperm.slane %v1111, 0
        %v1113 = vadd.f32 %v1099, %v1112
        %v1114 = vadd.f32 %v1100, %v1112
        %v1115 = vadd.f32 %v1101, %v1112
        %v1116 = vadd.f32 %v1102, %v1112
        %v1117 = vadd.f32 %v1103, %v1112
        %v1118 = vadd.f32 %v1104, %v1112
        %v1119 = vadd.f32 %v1105, %v1112
        %v1120 = vadd.f32 %v1106, %v1112
        %v1121 = vadd.f32 %v1107, %v1112
        %v1122 = vadd.f32 %v1108, %v1112
        %v1123 = vadd.f32 %v1109, %v1112
        %v1124 = vadd.f32 %v1110, %v1112
        %v1125 = vmax.f32 %v1113, 0.0
        %v1126 = vmax.f32 %v1114, 0.0
        %v1127 = vmax.f32 %v1115, 0.0
        %v1128 = vmax.f32 %v1116, 0.0
        %v1129 = vmax.f32 %v1117, 0.0
        %v1130 = vmax.f32 %v1118, 0.0
        %v1131 = vmax.f32 %v1119, 0.0
        %v1132 = vmax.f32 %v1120, 0.0
        %v1133 = vmax.f32 %v1121, 0.0
        %v1134 = vmax.f32 %v1122, 0.0
        %v1135 = vmax.f32 %v1123, 0.0
        %v1136 = vmax.f32 %v1124, 0.0
        %1137 = vst [vmem:[#allocation2] sm:$0xff] %v1125
        %1138 = vst [vmem:[#allocation2 + $0x8] sm:$0xff] %v1126
        %1139 = vst [vmem:[#allocation2 + $0x10] sm:$0xff] %v1127
        %1140 = vst [vmem:[#allocation2 + $0x18] sm:$0xff] %v1128
        %1141 = vst [vmem:[#allocation2 + $0x20] sm:$0xff] %v1129
        %1142 = vst [vmem:[#allocation2 + $0x28] sm:$0xff] %v1130
        %1143 = vst [vmem:[#allocation2 + $0x30] sm:$0xff] %v1131
        %1144 = vst [vmem:[#allocation2 + $0x38] sm:$0xff] %v1132
        %1145 = vst [vmem:[#allocation2 + $0x40] sm:$0xff] %v1133
        %1146 = vst [vmem:[#allocation2 + $0x48] sm:$0xff] %v1134
        %1147 = vst [vmem:[#allocation2 + $0x50] sm:$0xff] %v1135
        %1148 = vst [vmem:[#allocation2 + $0x58] sm:$0xff] %v1136
        %v1149 = vld [vmem:[#allocation2] sm:$0xff]
        %v1150 = vld [vmem:[#allocation2 + $0x8] sm:$0xff]
        %v1151 = vld [vmem:[#allocation2 + $0x10] sm:$0xff]
        %v1152 = vld [vmem:[#allocation2 + $0x18] sm:$0xff]
        %v1153 = vld [vmem:[#allocation2 + $0x20] sm:$0xff]
        %v1154 = vld [vmem:[#allocation2 + $0x28] sm:$0xff]
        %v1155 = vld [vmem:[#allocation2 + $0x30] sm:$0xff]
        %v1156 = vld [vmem:[#allocation2 + $0x38] sm:$0xff]
        %v1157 = vld [vmem:[#allocation2 + $0x40] sm:$0xff]
        %v1158 = vld [vmem:[#allocation2 + $0x48] sm:$0xff]
        %v1159 = vld [vmem:[#allocation2 + $0x50] sm:$0xff]
        %v1160 = vld [vmem:[#allocation2 + $0x58] sm:$0xff]
        %s1161 = scalar_lea.vmem [#allocation6], 1152
        %v1162 = vld [vmem:[%s1161] sm:$0xff]
        %v1163 = vld [vmem:[%s1161 + $0x8] sm:$0xff]
        %v1164 = vld [vmem:[%s1161 + $0x10] sm:$0xff]
        %v1165 = vld [vmem:[%s1161 + $0x18] sm:$0xff]
        %v1166 = vld [vmem:[%s1161 + $0x20] sm:$0xff]
        %v1167 = vld [vmem:[%s1161 + $0x28] sm:$0xff]
        %v1168 = vld [vmem:[%s1161 + $0x30] sm:$0xff]
        %v1169 = vld [vmem:[%s1161 + $0x38] sm:$0xff]
        %v1170 = vld [vmem:[%s1161 + $0x40] sm:$0xff]
        %v1171 = vld [vmem:[%s1161 + $0x48] sm:$0xff]
        %v1172 = vld [vmem:[%s1161 + $0x50] sm:$0xff]
        %v1173 = vld [vmem:[%s1161 + $0x58] sm:$0xff]
        %v1174 = vld [vmem:[%s1161 + $0x60] sm:$0xff]
        %v1175 = vld [vmem:[%s1161 + $0x68] sm:$0xff]
        %v1176 = vld [vmem:[%s1161 + $0x70] sm:$0xff]
        %v1177 = vld [vmem:[%s1161 + $0x78] sm:$0xff]
        %v1178 = vld [vmem:[#allocation2 + $0x1] sm:$0xff]
        %v1179 = vld [vmem:[#allocation2 + $0x9] sm:$0xff]
        %v1180 = vld [vmem:[#allocation2 + $0x11] sm:$0xff]
        %v1181 = vld [vmem:[#allocation2 + $0x19] sm:$0xff]
        %v1182 = vld [vmem:[#allocation2 + $0x21] sm:$0xff]
        %v1183 = vld [vmem:[#allocation2 + $0x29] sm:$0xff]
        %v1184 = vld [vmem:[#allocation2 + $0x31] sm:$0xff]
        %v1185 = vld [vmem:[#allocation2 + $0x39] sm:$0xff]
        %v1186 = vld [vmem:[#allocation2 + $0x41] sm:$0xff]
        %v1187 = vld [vmem:[#allocation2 + $0x49] sm:$0xff]
        %v1188 = vld [vmem:[#allocation2 + $0x51] sm:$0xff]
        %v1189 = vld [vmem:[#allocation2 + $0x59] sm:$0xff]
        %s1190 = scalar_lea.vmem [#allocation6], 1280
        %v1191 = vld [vmem:[%s1190] sm:$0xff]
        %v1192 = vld [vmem:[%s1190 + $0x8] sm:$0xff]
        %v1193 = vld [vmem:[%s1190 + $0x10] sm:$0xff]
        %v1194 = vld [vmem:[%s1190 + $0x18] sm:$0xff]
        %v1195 = vld [vmem:[%s1190 + $0x20] sm:$0xff]
        %v1196 = vld [vmem:[%s1190 + $0x28] sm:$0xff]
        %v1197 = vld [vmem:[%s1190 + $0x30] sm:$0xff]
        %v1198 = vld [vmem:[%s1190 + $0x38] sm:$0xff]
        %v1199 = vld [vmem:[%s1190 + $0x40] sm:$0xff]
        %v1200 = vld [vmem:[%s1190 + $0x48] sm:$0xff]
        %v1201 = vld [vmem:[%s1190 + $0x50] sm:$0xff]
        %v1202 = vld [vmem:[%s1190 + $0x58] sm:$0xff]
        %v1203 = vld [vmem:[%s1190 + $0x60] sm:$0xff]
        %v1204 = vld [vmem:[%s1190 + $0x68] sm:$0xff]
        %v1205 = vld [vmem:[%s1190 + $0x70] sm:$0xff]
        %v1206 = vld [vmem:[%s1190 + $0x78] sm:$0xff]
        %1207 = vmatpush.msra.mxu0 %v1206
        %1208 = vmatpush.msra.mxu0 %v1205
        %1209 = vmatpush.msra.mxu0 %v1204
        %1210 = vmatpush.msra.mxu0 %v1203
        %1211 = vmatpush.msra.mxu0 %v1202
        %1212 = vmatpush.msra.mxu0 %v1201
        %1213 = vmatpush.msra.mxu0 %v1200
        %1214 = vmatpush.msra.mxu0 %v1199
        %1215 = vmatpush.msra.mxu0 %v1198
        %1216 = vmatpush.msra.mxu0 %v1197
        %1217 = vmatpush.msra.mxu0 %v1196
        %1218 = vmatpush.msra.mxu0 %v1195
        %1219 = vmatpush.msra.mxu0 %v1194
        %1220 = vmatpush.msra.mxu0 %v1193
        %1221 = vmatpush.msra.mxu0 %v1192
        %1222 = vmatpush.msra.mxu0 %v1191
        %1223 = vmatmul.f32.gmra.mxu0 %v1178
        %v1224 = vpop.f32.mrf.mxu0
        %v1225 = vadd.f32 0.0, %v1224
        %1226 = vmatmul.f32.gmra.mxu0 %v1179
        %v1227 = vpop.f32.mrf.mxu0
        %v1228 = vadd.f32 0.0, %v1227
        %1229 = vmatmul.f32.gmra.mxu0 %v1180
        %v1230 = vpop.f32.mrf.mxu0
        %v1231 = vadd.f32 0.0, %v1230
        %1232 = vmatmul.f32.gmra.mxu0 %v1181
        %v1233 = vpop.f32.mrf.mxu0
        %v1234 = vadd.f32 0.0, %v1233
        %1235 = vmatmul.f32.gmra.mxu0 %v1182
        %v1236 = vpop.f32.mrf.mxu0
        %v1237 = vadd.f32 0.0, %v1236
        %1238 = vmatmul.f32.gmra.mxu0 %v1183
        %v1239 = vpop.f32.mrf.mxu0
        %1240 = vmatmul.f32.gmra.mxu0 %v1184
        %v1241 = vpop.f32.mrf.mxu0
        %v1242 = vadd.f32 0.0, %v1241
        %1243 = vmatmul.f32.gmra.mxu0 %v1185
        %v1244 = vpop.f32.mrf.mxu0
        %v1245 = vadd.f32 0.0, %v1244
        %1246 = vmatmul.f32.gmra.mxu0 %v1186
        %v1247 = vpop.f32.mrf.mxu0
        %v1248 = vadd.f32 0.0, %v1247
        %1249 = vmatmul.f32.gmra.mxu0 %v1187
        %v1250 = vpop.f32.mrf.mxu0
        %v1251 = vadd.f32 0.0, %v1250
        %1252 = vmatmul.f32.gmra.mxu0 %v1188
        %v1253 = vpop.f32.mrf.mxu0
        %v1254 = vadd.f32 0.0, %v1253
        %1255 = vmatmul.f32.gmra.mxu0 %v1189
        %v1256 = vpop.f32.mrf.mxu0
        %1257 = vdwg.mxu0
        %1258 = vmatpush.msra.mxu0 %v1177
        %1259 = vmatpush.msra.mxu0 %v1176
        %1260 = vmatpush.msra.mxu0 %v1175
        %1261 = vmatpush.msra.mxu0 %v1174
        %1262 = vmatpush.msra.mxu0 %v1173
        %1263 = vmatpush.msra.mxu0 %v1172
        %1264 = vmatpush.msra.mxu0 %v1171
        %1265 = vmatpush.msra.mxu0 %v1170
        %1266 = vmatpush.msra.mxu0 %v1169
        %1267 = vmatpush.msra.mxu0 %v1168
        %1268 = vmatpush.msra.mxu0 %v1167
        %1269 = vmatpush.msra.mxu0 %v1166
        %1270 = vmatpush.msra.mxu0 %v1165
        %1271 = vmatpush.msra.mxu0 %v1164
        %1272 = vmatpush.msra.mxu0 %v1163
        %1273 = vmatpush.msra.mxu0 %v1162
        %1274 = vmatmul.f32.gmra.mxu0 %v1149
        %v1275 = vpop.f32.mrf.mxu0
        %v1276 = vadd.f32 %v1225, %v1275
        %1277 = vmatmul.f32.gmra.mxu0 %v1150
        %v1278 = vpop.f32.mrf.mxu0
        %v1279 = vadd.f32 %v1228, %v1278
        %1280 = vmatmul.f32.gmra.mxu0 %v1151
        %v1281 = vpop.f32.mrf.mxu0
        %v1282 = vadd.f32 %v1231, %v1281
        %1283 = vmatmul.f32.gmra.mxu0 %v1152
        %v1284 = vpop.f32.mrf.mxu0
        %v1285 = vadd.f32 %v1234, %v1284
        %1286 = vmatmul.f32.gmra.mxu0 %v1153
        %v1287 = vpop.f32.mrf.mxu0
        %v1288 = vadd.f32 %v1237, %v1287
        %1289 = vmatmul.f32.gmra.mxu0 %v1154
        %v1290 = vpop.f32.mrf.mxu0
        %1291 = vmatmul.f32.gmra.mxu0 %v1155
        %v1292 = vpop.f32.mrf.mxu0
        %v1293 = vadd.f32 %v1242, %v1292
        %1294 = vmatmul.f32.gmra.mxu0 %v1156
        %v1295 = vpop.f32.mrf.mxu0
        %v1296 = vadd.f32 %v1245, %v1295
        %1297 = vmatmul.f32.gmra.mxu0 %v1157
        %v1298 = vpop.f32.mrf.mxu0
        %v1299 = vadd.f32 %v1248, %v1298
        %1300 = vmatmul.f32.gmra.mxu0 %v1158
        %v1301 = vpop.f32.mrf.mxu0
        %v1302 = vadd.f32 %v1251, %v1301
        %1303 = vmatmul.f32.gmra.mxu0 %v1159
        %v1304 = vpop.f32.mrf.mxu0
        %v1305 = vadd.f32 %v1254, %v1304
        %1306 = vmatmul.f32.gmra.mxu0 %v1160
        %v1307 = vpop.f32.mrf.mxu0
        %1308 = vdwg.mxu0
        %v1309 = vld [vmem:[#allocation2 + $0x2] sm:$0xff]
        %v1310 = vld [vmem:[#allocation2 + $0xa] sm:$0xff]
        %v1311 = vld [vmem:[#allocation2 + $0x12] sm:$0xff]
        %v1312 = vld [vmem:[#allocation2 + $0x1a] sm:$0xff]
        %v1313 = vld [vmem:[#allocation2 + $0x22] sm:$0xff]
        %v1314 = vld [vmem:[#allocation2 + $0x2a] sm:$0xff]
        %v1315 = vld [vmem:[#allocation2 + $0x32] sm:$0xff]
        %v1316 = vld [vmem:[#allocation2 + $0x3a] sm:$0xff]
        %v1317 = vld [vmem:[#allocation2 + $0x42] sm:$0xff]
        %v1318 = vld [vmem:[#allocation2 + $0x4a] sm:$0xff]
        %v1319 = vld [vmem:[#allocation2 + $0x52] sm:$0xff]
        %v1320 = vld [vmem:[#allocation2 + $0x5a] sm:$0xff]
        %s1321 = scalar_lea.vmem [#allocation6], 1408
        %v1322 = vld [vmem:[%s1321] sm:$0xff]
        %v1323 = vld [vmem:[%s1321 + $0x8] sm:$0xff]
        %v1324 = vld [vmem:[%s1321 + $0x10] sm:$0xff]
        %v1325 = vld [vmem:[%s1321 + $0x18] sm:$0xff]
        %v1326 = vld [vmem:[%s1321 + $0x20] sm:$0xff]
        %v1327 = vld [vmem:[%s1321 + $0x28] sm:$0xff]
        %v1328 = vld [vmem:[%s1321 + $0x30] sm:$0xff]
        %v1329 = vld [vmem:[%s1321 + $0x38] sm:$0xff]
        %v1330 = vld [vmem:[%s1321 + $0x40] sm:$0xff]
        %v1331 = vld [vmem:[%s1321 + $0x48] sm:$0xff]
        %v1332 = vld [vmem:[%s1321 + $0x50] sm:$0xff]
        %v1333 = vld [vmem:[%s1321 + $0x58] sm:$0xff]
        %v1334 = vld [vmem:[%s1321 + $0x60] sm:$0xff]
        %v1335 = vld [vmem:[%s1321 + $0x68] sm:$0xff]
        %v1336 = vld [vmem:[%s1321 + $0x70] sm:$0xff]
        %v1337 = vld [vmem:[%s1321 + $0x78] sm:$0xff]
        %1338 = vmatpush.msra.mxu0 %v1337
        %1339 = vmatpush.msra.mxu0 %v1336
        %1340 = vmatpush.msra.mxu0 %v1335
        %1341 = vmatpush.msra.mxu0 %v1334
        %1342 = vmatpush.msra.mxu0 %v1333
        %1343 = vmatpush.msra.mxu0 %v1332
        %1344 = vmatpush.msra.mxu0 %v1331
        %1345 = vmatpush.msra.mxu0 %v1330
        %1346 = vmatpush.msra.mxu0 %v1329
        %1347 = vmatpush.msra.mxu0 %v1328
        %1348 = vmatpush.msra.mxu0 %v1327
        %1349 = vmatpush.msra.mxu0 %v1326
        %1350 = vmatpush.msra.mxu0 %v1325
        %1351 = vmatpush.msra.mxu0 %v1324
        %1352 = vmatpush.msra.mxu0 %v1323
        %1353 = vmatpush.msra.mxu0 %v1322
        %1354 = vmatmul.f32.gmra.mxu0 %v1309
        %v1355 = vpop.f32.mrf.mxu0
        %v1356 = vadd.f32 0.0, %v1355
        %1357 = vmatmul.f32.gmra.mxu0 %v1310
        %v1358 = vpop.f32.mrf.mxu0
        %v1359 = vadd.f32 0.0, %v1358
        %1360 = vmatmul.f32.gmra.mxu0 %v1311
        %v1361 = vpop.f32.mrf.mxu0
        %v1362 = vadd.f32 0.0, %v1361
        %1363 = vmatmul.f32.gmra.mxu0 %v1312
        %v1364 = vpop.f32.mrf.mxu0
        %v1365 = vadd.f32 0.0, %v1364
        %1366 = vmatmul.f32.gmra.mxu0 %v1313
        %v1367 = vpop.f32.mrf.mxu0
        %v1368 = vadd.f32 0.0, %v1367
        %1369 = vmatmul.f32.gmra.mxu0 %v1314
        %v1370 = vpop.f32.mrf.mxu0
        %1371 = vmatmul.f32.gmra.mxu0 %v1315
        %v1372 = vpop.f32.mrf.mxu0
        %v1373 = vadd.f32 0.0, %v1372
        %1374 = vmatmul.f32.gmra.mxu0 %v1316
        %v1375 = vpop.f32.mrf.mxu0
        %v1376 = vadd.f32 0.0, %v1375
        %1377 = vmatmul.f32.gmra.mxu0 %v1317
        %v1378 = vpop.f32.mrf.mxu0
        %v1379 = vadd.f32 0.0, %v1378
        %1380 = vmatmul.f32.gmra.mxu0 %v1318
        %v1381 = vpop.f32.mrf.mxu0
        %v1382 = vadd.f32 0.0, %v1381
        %1383 = vmatmul.f32.gmra.mxu0 %v1319
        %v1384 = vpop.f32.mrf.mxu0
        %v1385 = vadd.f32 0.0, %v1384
        %1386 = vmatmul.f32.gmra.mxu0 %v1320
        %v1387 = vpop.f32.mrf.mxu0
        %1388 = vdwg.mxu0
        %v1389 = vadd.f32 %v1276, %v1356
        %v1390 = vadd.f32 %v1279, %v1359
        %v1391 = vadd.f32 %v1282, %v1362
        %v1392 = vadd.f32 %v1285, %v1365
        %v1393 = vadd.f32 %v1288, %v1368
        %v1394 = vadd.f32 %v1293, %v1373
        %v1395 = vadd.f32 %v1296, %v1376
        %v1396 = vadd.f32 %v1299, %v1379
        %v1397 = vadd.f32 %v1302, %v1382
        %v1398 = vadd.f32 %v1305, %v1385
        %v1399 = vld [vmem:[#allocation8 + $0x3] sm:$0x1]
        %v1400 = vperm.slane %v1399, 0
        %v1401 = vadd.f32 %v1389, %v1400
        %v1402 = vadd.f32 %v1390, %v1400
        %v1403 = vadd.f32 %v1391, %v1400
        %v1404 = vadd.f32 %v1392, %v1400
        %v1405 = vadd.f32 %v1393, %v1400
        %v1406 = vadd.f32 %v1394, %v1400
        %v1407 = vadd.f32 %v1395, %v1400
        %v1408 = vadd.f32 %v1396, %v1400
        %v1409 = vadd.f32 %v1397, %v1400
        %v1410 = vadd.f32 %v1398, %v1400
        %v1411 = vmax.f32 %v1401, 0.0
        %v1412 = vmax.f32 %v1402, 0.0
        %v1413 = vmax.f32 %v1403, 0.0
        %v1414 = vmax.f32 %v1404, 0.0
        %v1415 = vmax.f32 %v1405, 0.0
        %v1416 = vmax.f32 %v1406, 0.0
        %v1417 = vmax.f32 %v1407, 0.0
        %v1418 = vmax.f32 %v1408, 0.0
        %v1419 = vmax.f32 %v1409, 0.0
        %v1420 = vmax.f32 %v1410, 0.0
        %v1421 = vadd.f32 %v1411, %v829
        %v1422 = vadd.f32 %v1412, %v830
        %v1423 = vadd.f32 %v1413, %v831
        %v1424 = vadd.f32 %v1414, %v832
        %v1425 = vadd.f32 %v1415, %v833
        %v1426 = vadd.f32 %v1416, %v835
        %v1427 = vadd.f32 %v1417, %v836
        %v1428 = vadd.f32 %v1418, %v837
        %v1429 = vadd.f32 %v1419, %v838
        %v1430 = vadd.f32 %v1420, %v839
        %1431 = vst [vmem:[%s222] sm:$0xff] %v1421
        %1432 = vst [vmem:[%s222 + $0x8] sm:$0xff] %v1422
        %1433 = vst [vmem:[%s222 + $0x10] sm:$0xff] %v1423
        %1434 = vst [vmem:[%s222 + $0x18] sm:$0xff] %v1424
        %1435 = vst [vmem:[%s222 + $0x20] sm:$0xff] %v1425
        %1436 = vst [vmem:[%s222 + $0x28] sm:$0xff] %v1426
        %1437 = vst [vmem:[%s222 + $0x30] sm:$0xff] %v1427
        %1438 = vst [vmem:[%s222 + $0x38] sm:$0xff] %v1428
        %1439 = vst [vmem:[%s222 + $0x40] sm:$0xff] %v1429
        %1440 = vst [vmem:[%s222 + $0x48] sm:$0xff] %v1430
        %s1441 = sand.u32 %s97, 1
        %s1442 = scalar_lea.sflag [#allocation5], %s1441
        %s1443 = sand.u32 %s97, 1
        %s1444 = smul.addr %s1443, 80
        %s1445 = scalar_lea.vmem [#allocation9], %s1444
        // Predicated region
        $region45: #{tpu_custom_call.1} parent=31 // pred_check
          %p1446 = pneg %p107
        $region46: #{tpu_custom_call.1} parent=31 // pred_check_branch
          %1448 = sbr.rel (%p1446) target = $region48
        $region47: #{tpu_custom_call.1} parent=31 // pred_region
          %s1449 = smul.u32 2, %s21
          %1451 = vsyncadd %s1442, 0
          %s1452 = smul.addr %s1449, 5
          %s1453 = smul.addr %s1452, 8
          %s1454 = scalar_lea.hbm %s3, %s1453
          %s1455 = sshll.u32 %s1445, 4
          %s1456 = int_to_ptr.vmem [resolvable:$true] %s1455
          %s1457 = sshll.u32 %s1454, 4
          %s1458 = int_to_ptr.hbm [resolvable:$true] %s1457
          %1463 = dma.vmem_to_hbm [thread:$0]  %s1456, 1280, %s1458, %s1442, 128, 128, 8
        $region48: #{tpu_custom_call.1} parent=31 // pred_fallthru
          _
      $region32: #{tpu_custom_call.1} parent=5 // pred_fallthru
        _
      %p1464 = scmp.le.s32.totalorder 2, %s16
      // Predicated region
      $region49: #{tpu_custom_call.1} parent=5 // pred_check
        %p1465 = pneg %p1464
      $region50: #{tpu_custom_call.1} parent=5 // pred_check_branch
        %1467 = sbr.rel (%p1465) target = $region52
      $region51: #{tpu_custom_call.1} parent=5 // pred_region
        %s1468 = ssub.s32 %s16, 2
        // Predicated region
        $region53: #{tpu_custom_call.1} parent=51 // pred_check
          %p1469 = pneg %p113
        $region54: #{tpu_custom_call.1} parent=51 // pred_check_branch
          %1471 = sbr.rel (%p1469) target = $region56
        $region55: #{tpu_custom_call.1} parent=51 // pred_region
          %s1472 = sand.u32 %s98, 1
          %s1473 = scalar_lea.sflag [#allocation5], %s1472
          %s1474 = sand.u32 %s98, 1
          %s1475 = smul.addr %s1474, 80
          %s1476 = scalar_lea.vmem [#allocation9], %s1475
          %1478 = dma.done %s1473, 1280
        $region56: #{tpu_custom_call.1} parent=51 // pred_fallthru
          _
      $region52: #{tpu_custom_call.1} parent=5 // pred_fallthru
        _
    $region6: #{tpu_custom_call.1} parent=1 // loop_footer
      %s20 = sadd.s32 1, %s16
    $region7: #{tpu_custom_call.1} parent=1 // loop_footer_branch
      %15 = sbr.rel target = $region3
    $region8: #{tpu_custom_call.1} parent=1 // loop_exit
      _
    %1479 = vsyncpa [#allocation4], 1
    %s1480 = scalar_lea.sflag [#allocation4], 1
    %1481 = vsyncpa %s1480, 1
    %1482 = vsyncpa [#allocation7], 1
    %1483 = vsyncpa [#allocation5], 1
    %s1484 = scalar_lea.sflag [#allocation5], 1
    %1485 = vsyncpa %s1484, 1

</llo_original>
